<compile_context>
chip_gen: v6e
topology: v6e:2x2x1
jax: 0.10.0
libtpu: 0.0.40
codegen_flags: <defaults>
</compile_context>

<pallas_src>
import functools
from math import sqrt

import jax
import jax.numpy as jnp
from jax.experimental import pallas as pl
from jax.experimental.pallas import tpu as pltpu


# ------------------------------ kernel --------------------------------------


def _mha_kernel(x_ref, w_ref, o_ref, *, B, S, E, H):
    # x_ref: (B*S, E) f32
    # w_ref: (2E+2, EPAD) f32 packed slab:
    #   rows [0:E)      -> W_qkv  (Q cols pre-scaled by 1/divider | K | V | zero pad)
    #   rows [E:2E)     -> Wo     (E out-cols | zero pad)
    #   row  [2E]       -> b_qkv  (3E lanes | zero pad)
    #   row  [2E+1]     -> bo     (E lanes | zero pad)
    # o_ref: (B*S, EPAD) f32
    D = E // H
    BS = B * S

    x = x_ref[...]                                    # (B*S, E)
    w_qkv = w_ref[0:E, :]                             # (E, EPAD)
    w_o = w_ref[E:2 * E, :]                           # (E, EPAD)
    b_qkv = w_ref[2 * E:2 * E + 1, :]                 # (1, EPAD)
    b_o = w_ref[2 * E + 1:2 * E + 2, :]               # (1, EPAD)

    # One fused QKV projection matmul: (B*S, E) @ (E, EPAD) -> (B*S, EPAD).
    qkv = jnp.dot(x, w_qkv, preferred_element_type=jnp.float32) + b_qkv

    ctx_heads = []
    for h in range(H):                                # H = 4, statically unrolled
        q = qkv[:, h * D:(h + 1) * D].reshape(B, S, D)
        k = qkv[:, E + h * D:E + (h + 1) * D].reshape(B, S, D)
        v = qkv[:, 2 * E + h * D:2 * E + (h + 1) * D].reshape(B, S, D)

        # 1/divider already folded into the Q columns of the packed slab.
        energy = jnp.einsum('bqd,bkd->bqk', q, k,
                            preferred_element_type=jnp.float32)       # (B, S, S)
        energy = energy - jnp.max(energy, axis=-1, keepdims=True)
        p = jnp.exp(energy)
        attn = p * pl.reciprocal(jnp.sum(p, axis=-1, keepdims=True), approx=True)

        ctx = jnp.einsum('bqk,bkd->bqd', attn, v,
                         preferred_element_type=jnp.float32)          # (B, S, D)
        ctx_heads.append(ctx.reshape(BS, D))

    # Heads along lanes -> single (B*S, E) value == concat(heads).
    ctx_all = jnp.concatenate(ctx_heads, axis=-1)

    # One fused output projection: (B*S, E) @ (E, EPAD) -> lane-dense store.
    out = jnp.dot(ctx_all, w_o, preferred_element_type=jnp.float32) + b_o
    o_ref[...] = out


# ------------------------------ wrapper -------------------------------------


def multi_head_attention_fwd(x, packed, *, num_heads):
    B, S, E = x.shape
    EPAD = packed.shape[-1]
    x2d = x.reshape(B * S, E)                         # free reshape in XLA

    kernel = functools.partial(_mha_kernel, B=B, S=S, E=E, H=num_heads)
    vmem = pl.BlockSpec(memory_space=pltpu.MemorySpace.VMEM)

    out = pl.pallas_call(
        kernel,
        out_shape=jax.ShapeDtypeStruct((B * S, EPAD), jnp.float32),
        in_specs=[vmem, vmem],                        # 2 DMAs total
        out_specs=vmem,
    )(x2d, packed)
    return out[:, :E].reshape(B, S, E)                # drop lane padding outside


# --------------------------- parameter prep ---------------------------------


def _linear_init(key, fan_in, fan_out):
    # nn.Linear init: U(-1/sqrt(fan_in), 1/sqrt(fan_in)); W stored as (in, out).
    kw, kb = jax.random.split(key)
    bound = 1.0 / sqrt(fan_in)
    w = jax.random.uniform(kw, (fan_in, fan_out), jnp.float32, -bound, bound)
    b = jax.random.uniform(kb, (fan_out,), jnp.float32, -bound, bound)
    return w, b


def prepare_params(params, *, embed_size, num_heads):
    """One-time (outside the hot path) packing of all weights into one slab."""
    E, H = embed_size, num_heads
    D = E // H
    EPAD = max(128, ((3 * E + 127) // 128) * 128)
    divider = float(int(sqrt(D)))                     # matches the PyTorch module
    inv_div = 1.0 / divider

    w_qkv = jnp.concatenate(
        [params["wq"] * inv_div, params["wk"], params["wv"]], axis=1)   # (E, 3E)
    b_qkv = jnp.concatenate(
        [params["bq"] * inv_div, params["bk"], params["bv"]])           # (3E,)

    w_qkv = jnp.pad(w_qkv, ((0, 0), (0, EPAD - 3 * E)))                 # (E, EPAD)
    b_qkv = jnp.pad(b_qkv, (0, EPAD - 3 * E))                           # (EPAD,)
    w_o = jnp.pad(params["wo"], ((0, 0), (0, EPAD - E)))                # (E, EPAD)
    b_o = jnp.pad(params["bo"], (0, EPAD - E))                          # (EPAD,)

    packed = jnp.concatenate(
        [w_qkv, w_o, b_qkv[None, :], b_o[None, :]], axis=0)             # (2E+2, EPAD)
    return packed.astype(jnp.float32)


# --------------------------- pure-JAX reference ------------------------------


def mha_reference(x, params, *, num_heads):
    B, S, E = x.shape
    D = E // num_heads
    divider = float(int(sqrt(D)))
    q = x @ params["wq"] + params["bq"]
    k = x @ params["wk"] + params["bk"]
    v = x @ params["wv"] + params["bv"]

    def split(t):
        return t.reshape(B, S, num_heads, D).transpose(0, 2, 1, 3)      # (B,H,S,D)

    q, k, v = split(q), split(k), split(v)
    energy = jnp.einsum('bhqd,bhkd->bhqk', q, k) / divider
    attn = jax.nn.softmax(energy, axis=-1)
    out = jnp.einsum('bhqk,bhkd->bhqd', attn, v)
    out = out.transpose(0, 2, 1, 3).reshape(B, S, E)
    return out @ params["wo"] + params["bo"]


# --------------------------------- main --------------------------------------


if __name__ == "__main__":
    batch, seq_len, embed_size, num_heads = 2, 16, 32, 4

    key = jax.random.PRNGKey(0)
    kx, kq, kk, kv, ko = jax.random.split(key, 5)
    x = jax.random.normal(kx, (batch, seq_len, embed_size), jnp.float32)

    wq, bq = _linear_init(kq, embed_size, embed_size)
    wk, bk = _linear_init(kk, embed_size, embed_size)
    wv, bv = _linear_init(kv, embed_size, embed_size)
    wo, bo = _linear_init(ko, embed_size, embed_size)
    params = dict(wq=wq, bq=bq, wk=wk, bk=bk, wv=wv, bv=bv, wo=wo, bo=bo)

    packed = prepare_params(params, embed_size=embed_size, num_heads=num_heads)

    fwd = jax.jit(functools.partial(multi_head_attention_fwd, num_heads=num_heads))
    out = jax.block_until_ready(fwd(x, packed))

    assert out.shape == (batch, seq_len, embed_size), out.shape
    assert bool(jnp.all(jnp.isfinite(out)))

    ref = mha_reference(x, params, num_heads=num_heads)
    max_err = float(jnp.max(jnp.abs(out - ref)))
    assert bool(jnp.allclose(out, ref, atol=2e-2, rtol=2e-2)), max_err

    print("KERNEL_OK")
</pallas_src>

<mosaic_0001>
module attributes {stable_mosaic.version = 11 : i64} {
  func.func @_mha_kernel(%arg0: memref<32x32xf32, #tpu.memory_space<vmem>>, %arg1: memref<66x128xf32, #tpu.memory_space<vmem>>, %arg2: memref<32x128xf32, #tpu.memory_space<vmem>>) attributes {dimension_semantics = [], scalar_prefetch = 0 : i64, scratch_operands = 0 : i64, tpu.core_type = #tpu.core_type<tc>} {
    %c0 = arith.constant 0 : index
    %c0_0 = arith.constant 0 : index
    %0 = vector.load %arg0[%c0, %c0_0] : memref<32x32xf32, #tpu.memory_space<vmem>>, vector<32x32xf32>
    %c0_1 = arith.constant 0 : index
    %c0_2 = arith.constant 0 : index
    %1 = vector.load %arg1[%c0_1, %c0_2] : memref<66x128xf32, #tpu.memory_space<vmem>>, vector<32x128xf32>
    %c32 = arith.constant 32 : index
    %c0_3 = arith.constant 0 : index
    %2 = vector.load %arg1[%c32, %c0_3] : memref<66x128xf32, #tpu.memory_space<vmem>>, vector<32x128xf32>
    %c64 = arith.constant 64 : index
    %c0_4 = arith.constant 0 : index
    %3 = vector.load %arg1[%c64, %c0_4] : memref<66x128xf32, #tpu.memory_space<vmem>>, vector<1x128xf32>
    %c65 = arith.constant 65 : index
    %c0_5 = arith.constant 0 : index
    %4 = vector.load %arg1[%c65, %c0_5] : memref<66x128xf32, #tpu.memory_space<vmem>>, vector<1x128xf32>
    %cst = arith.constant dense<0.000000e+00> : vector<32x128xf32>
    %5 = tpu.matmul %0, %1, %cst {dimension_numbers = #tpu.dot_dimension_numbers<[1], [0], [0], [1], [0, 0, 1, 1], [], []>} : vector<32x32xf32>, vector<32x128xf32>, vector<32x128xf32> -> vector<32x128xf32>
    %6 = vector.broadcast %3 : vector<1x128xf32> to vector<32x128xf32>
    %7 = arith.addf %5, %6 : vector<32x128xf32>
    %8 = vector.extract_strided_slice %7 {offsets = [0, 0], sizes = [32, 8], strides = [1, 1]} : vector<32x128xf32> to vector<32x8xf32>
    %9 = vector.shape_cast %8 : vector<32x8xf32> to vector<2x16x8xf32>
    %10 = vector.extract_strided_slice %7 {offsets = [0, 32], sizes = [32, 8], strides = [1, 1]} : vector<32x128xf32> to vector<32x8xf32>
    %11 = vector.shape_cast %10 : vector<32x8xf32> to vector<2x16x8xf32>
    %12 = vector.extract_strided_slice %7 {offsets = [0, 64], sizes = [32, 8], strides = [1, 1]} : vector<32x128xf32> to vector<32x8xf32>
    %13 = vector.shape_cast %12 : vector<32x8xf32> to vector<2x16x8xf32>
    "tpu.trace_start"() <{level = 10 : i32, message = "bqd,bkd->bqk"}> : () -> ()
    %cst_6 = arith.constant dense<0.000000e+00> : vector<2x16x16xf32>
    %14 = tpu.matmul %9, %11, %cst_6 {dimension_numbers = #tpu.dot_dimension_numbers<[2], [2], [1], [1], [0, 0, 0, 1, 1, 1], [0], [0]>} : vector<2x16x8xf32>, vector<2x16x8xf32>, vector<2x16x16xf32> -> vector<2x16x16xf32>
    "tpu.trace_stop"() : () -> ()
    %cst_7 = arith.constant dense<0xFF800000> : vector<2x16xf32>
    %15 = vector.multi_reduction <maximumf>, %14, %cst_7 [2] : vector<2x16x16xf32> to vector<2x16xf32>
    %16 = vector.shape_cast %15 : vector<2x16xf32> to vector<2x16x1xf32>
    %17 = vector.broadcast %16 : vector<2x16x1xf32> to vector<2x16x16xf32>
    %18 = arith.subf %14, %17 : vector<2x16x16xf32>
    %19 = math.exp %18 : vector<2x16x16xf32>
    %cst_8 = arith.constant dense<0.000000e+00> : vector<2x16xf32>
    %20 = vector.multi_reduction <add>, %19, %cst_8 [2] : vector<2x16x16xf32> to vector<2x16xf32>
    %21 = vector.shape_cast %20 : vector<2x16xf32> to vector<2x16x1xf32>
    %22 = tpu.reciprocal %21 {approx = true} : vector<2x16x1xf32> -> vector<2x16x1xf32>
    %23 = vector.broadcast %22 : vector<2x16x1xf32> to vector<2x16x16xf32>
    %24 = arith.mulf %19, %23 : vector<2x16x16xf32>
    "tpu.trace_start"() <{level = 10 : i32, message = "bqk,bkd->bqd"}> : () -> ()
    %cst_9 = arith.constant dense<0.000000e+00> : vector<2x16x8xf32>
    %25 = tpu.matmul %24, %13, %cst_9 {dimension_numbers = #tpu.dot_dimension_numbers<[2], [1], [1], [2], [0, 0, 0, 1, 1, 2], [0], [0]>} : vector<2x16x16xf32>, vector<2x16x8xf32>, vector<2x16x8xf32> -> vector<2x16x8xf32>
    "tpu.trace_stop"() : () -> ()
    %26 = vector.shape_cast %25 : vector<2x16x8xf32> to vector<32x8xf32>
    %27 = vector.extract_strided_slice %7 {offsets = [0, 8], sizes = [32, 8], strides = [1, 1]} : vector<32x128xf32> to vector<32x8xf32>
    %28 = vector.shape_cast %27 : vector<32x8xf32> to vector<2x16x8xf32>
    %29 = vector.extract_strided_slice %7 {offsets = [0, 40], sizes = [32, 8], strides = [1, 1]} : vector<32x128xf32> to vector<32x8xf32>
    %30 = vector.shape_cast %29 : vector<32x8xf32> to vector<2x16x8xf32>
    %31 = vector.extract_strided_slice %7 {offsets = [0, 72], sizes = [32, 8], strides = [1, 1]} : vector<32x128xf32> to vector<32x8xf32>
    %32 = vector.shape_cast %31 : vector<32x8xf32> to vector<2x16x8xf32>
    "tpu.trace_start"() <{level = 10 : i32, message = "bqd,bkd->bqk"}> : () -> ()
    %cst_10 = arith.constant dense<0.000000e+00> : vector<2x16x16xf32>
    %33 = tpu.matmul %28, %30, %cst_10 {dimension_numbers = #tpu.dot_dimension_numbers<[2], [2], [1], [1], [0, 0, 0, 1, 1, 1], [0], [0]>} : vector<2x16x8xf32>, vector<2x16x8xf32>, vector<2x16x16xf32> -> vector<2x16x16xf32>
    "tpu.trace_stop"() : () -> ()
    %cst_11 = arith.constant dense<0xFF800000> : vector<2x16xf32>
    %34 = vector.multi_reduction <maximumf>, %33, %cst_11 [2] : vector<2x16x16xf32> to vector<2x16xf32>
    %35 = vector.shape_cast %34 : vector<2x16xf32> to vector<2x16x1xf32>
    %36 = vector.broadcast %35 : vector<2x16x1xf32> to vector<2x16x16xf32>
    %37 = arith.subf %33, %36 : vector<2x16x16xf32>
    %38 = math.exp %37 : vector<2x16x16xf32>
    %cst_12 = arith.constant dense<0.000000e+00> : vector<2x16xf32>
    %39 = vector.multi_reduction <add>, %38, %cst_12 [2] : vector<2x16x16xf32> to vector<2x16xf32>
    %40 = vector.shape_cast %39 : vector<2x16xf32> to vector<2x16x1xf32>
    %41 = tpu.reciprocal %40 {approx = true} : vector<2x16x1xf32> -> vector<2x16x1xf32>
    %42 = vector.broadcast %41 : vector<2x16x1xf32> to vector<2x16x16xf32>
    %43 = arith.mulf %38, %42 : vector<2x16x16xf32>
    "tpu.trace_start"() <{level = 10 : i32, message = "bqk,bkd->bqd"}> : () -> ()
    %cst_13 = arith.constant dense<0.000000e+00> : vector<2x16x8xf32>
    %44 = tpu.matmul %43, %32, %cst_13 {dimension_numbers = #tpu.dot_dimension_numbers<[2], [1], [1], [2], [0, 0, 0, 1, 1, 2], [0], [0]>} : vector<2x16x16xf32>, vector<2x16x8xf32>, vector<2x16x8xf32> -> vector<2x16x8xf32>
    "tpu.trace_stop"() : () -> ()
    %45 = vector.shape_cast %44 : vector<2x16x8xf32> to vector<32x8xf32>
    %46 = vector.extract_strided_slice %7 {offsets = [0, 16], sizes = [32, 8], strides = [1, 1]} : vector<32x128xf32> to vector<32x8xf32>
    %47 = vector.shape_cast %46 : vector<32x8xf32> to vector<2x16x8xf32>
    %48 = vector.extract_strided_slice %7 {offsets = [0, 48], sizes = [32, 8], strides = [1, 1]} : vector<32x128xf32> to vector<32x8xf32>
    %49 = vector.shape_cast %48 : vector<32x8xf32> to vector<2x16x8xf32>
    %50 = vector.extract_strided_slice %7 {offsets = [0, 80], sizes = [32, 8], strides = [1, 1]} : vector<32x128xf32> to vector<32x8xf32>
    %51 = vector.shape_cast %50 : vector<32x8xf32> to vector<2x16x8xf32>
    "tpu.trace_start"() <{level = 10 : i32, message = "bqd,bkd->bqk"}> : () -> ()
    %cst_14 = arith.constant dense<0.000000e+00> : vector<2x16x16xf32>
    %52 = tpu.matmul %47, %49, %cst_14 {dimension_numbers = #tpu.dot_dimension_numbers<[2], [2], [1], [1], [0, 0, 0, 1, 1, 1], [0], [0]>} : vector<2x16x8xf32>, vector<2x16x8xf32>, vector<2x16x16xf32> -> vector<2x16x16xf32>
    "tpu.trace_stop"() : () -> ()
    %cst_15 = arith.constant dense<0xFF800000> : vector<2x16xf32>
    %53 = vector.multi_reduction <maximumf>, %52, %cst_15 [2] : vector<2x16x16xf32> to vector<2x16xf32>
    %54 = vector.shape_cast %53 : vector<2x16xf32> to vector<2x16x1xf32>
    %55 = vector.broadcast %54 : vector<2x16x1xf32> to vector<2x16x16xf32>
    %56 = arith.subf %52, %55 : vector<2x16x16xf32>
    %57 = math.exp %56 : vector<2x16x16xf32>
    %cst_16 = arith.constant dense<0.000000e+00> : vector<2x16xf32>
    %58 = vector.multi_reduction <add>, %57, %cst_16 [2] : vector<2x16x16xf32> to vector<2x16xf32>
    %59 = vector.shape_cast %58 : vector<2x16xf32> to vector<2x16x1xf32>
    %60 = tpu.reciprocal %59 {approx = true} : vector<2x16x1xf32> -> vector<2x16x1xf32>
    %61 = vector.broadcast %60 : vector<2x16x1xf32> to vector<2x16x16xf32>
    %62 = arith.mulf %57, %61 : vector<2x16x16xf32>
    "tpu.trace_start"() <{level = 10 : i32, message = "bqk,bkd->bqd"}> : () -> ()
    %cst_17 = arith.constant dense<0.000000e+00> : vector<2x16x8xf32>
    %63 = tpu.matmul %62, %51, %cst_17 {dimension_numbers = #tpu.dot_dimension_numbers<[2], [1], [1], [2], [0, 0, 0, 1, 1, 2], [0], [0]>} : vector<2x16x16xf32>, vector<2x16x8xf32>, vector<2x16x8xf32> -> vector<2x16x8xf32>
    "tpu.trace_stop"() : () -> ()
    %64 = vector.shape_cast %63 : vector<2x16x8xf32> to vector<32x8xf32>
    %65 = vector.extract_strided_slice %7 {offsets = [0, 24], sizes = [32, 8], strides = [1, 1]} : vector<32x128xf32> to vector<32x8xf32>
    %66 = vector.shape_cast %65 : vector<32x8xf32> to vector<2x16x8xf32>
    %67 = vector.extract_strided_slice %7 {offsets = [0, 56], sizes = [32, 8], strides = [1, 1]} : vector<32x128xf32> to vector<32x8xf32>
    %68 = vector.shape_cast %67 : vector<32x8xf32> to vector<2x16x8xf32>
    %69 = vector.extract_strided_slice %7 {offsets = [0, 88], sizes = [32, 8], strides = [1, 1]} : vector<32x128xf32> to vector<32x8xf32>
    %70 = vector.shape_cast %69 : vector<32x8xf32> to vector<2x16x8xf32>
    "tpu.trace_start"() <{level = 10 : i32, message = "bqd,bkd->bqk"}> : () -> ()
    %cst_18 = arith.constant dense<0.000000e+00> : vector<2x16x16xf32>
    %71 = tpu.matmul %66, %68, %cst_18 {dimension_numbers = #tpu.dot_dimension_numbers<[2], [2], [1], [1], [0, 0, 0, 1, 1, 1], [0], [0]>} : vector<2x16x8xf32>, vector<2x16x8xf32>, vector<2x16x16xf32> -> vector<2x16x16xf32>
    "tpu.trace_stop"() : () -> ()
    %cst_19 = arith.constant dense<0xFF800000> : vector<2x16xf32>
    %72 = vector.multi_reduction <maximumf>, %71, %cst_19 [2] : vector<2x16x16xf32> to vector<2x16xf32>
    %73 = vector.shape_cast %72 : vector<2x16xf32> to vector<2x16x1xf32>
    %74 = vector.broadcast %73 : vector<2x16x1xf32> to vector<2x16x16xf32>
    %75 = arith.subf %71, %74 : vector<2x16x16xf32>
    %76 = math.exp %75 : vector<2x16x16xf32>
    %cst_20 = arith.constant dense<0.000000e+00> : vector<2x16xf32>
    %77 = vector.multi_reduction <add>, %76, %cst_20 [2] : vector<2x16x16xf32> to vector<2x16xf32>
    %78 = vector.shape_cast %77 : vector<2x16xf32> to vector<2x16x1xf32>
    %79 = tpu.reciprocal %78 {approx = true} : vector<2x16x1xf32> -> vector<2x16x1xf32>
    %80 = vector.broadcast %79 : vector<2x16x1xf32> to vector<2x16x16xf32>
    %81 = arith.mulf %76, %80 : vector<2x16x16xf32>
    "tpu.trace_start"() <{level = 10 : i32, message = "bqk,bkd->bqd"}> : () -> ()
    %cst_21 = arith.constant dense<0.000000e+00> : vector<2x16x8xf32>
    %82 = tpu.matmul %81, %70, %cst_21 {dimension_numbers = #tpu.dot_dimension_numbers<[2], [1], [1], [2], [0, 0, 0, 1, 1, 2], [0], [0]>} : vector<2x16x16xf32>, vector<2x16x8xf32>, vector<2x16x8xf32> -> vector<2x16x8xf32>
    "tpu.trace_stop"() : () -> ()
    %83 = vector.shape_cast %82 : vector<2x16x8xf32> to vector<32x8xf32>
    %84 = tpu.concatenate %26, %45, %64, %83 in 1 : vector<32x8xf32>, vector<32x8xf32>, vector<32x8xf32>, vector<32x8xf32> -> vector<32x32xf32>
    %cst_22 = arith.constant dense<0.000000e+00> : vector<32x128xf32>
    %85 = tpu.matmul %84, %2, %cst_22 {dimension_numbers = #tpu.dot_dimension_numbers<[1], [0], [0], [1], [0, 0, 1, 1], [], []>} : vector<32x32xf32>, vector<32x128xf32>, vector<32x128xf32> -> vector<32x128xf32>
    %86 = vector.broadcast %4 : vector<1x128xf32> to vector<32x128xf32>
    %87 = arith.addf %85, %86 : vector<32x128xf32>
    %c0_23 = arith.constant 0 : index
    %c0_24 = arith.constant 0 : index
    %88 = vector.load %arg2[%c0_23, %c0_24] : memref<32x128xf32, #tpu.memory_space<vmem>>, vector<32x128xf32>
    tpu.vector_store %arg2[%c0_23, %c0_24], %87 {strides = array<i32>} : memref<32x128xf32, #tpu.memory_space<vmem>>, vector<32x128xf32>,
    return
  }
}

</mosaic_0001>

<llo_original>
// kernel: multi_head_attention_fwd.1
$region0: #{multi_head_attention_fwd.1}
  #allocation0 [shape = 'u32[]', space=smem, size = 0x4, offset = 0x4, fixed_abs, tag = 'smem constant byte address 0x4 - core index']
  #allocation1 [shape = 'u32[144,128]{1,0:T(1,128)}', space=vmem, size = 0x12000, scoped, tag = 'internal scratch']
  %s0 = inlined_call_operand.hbm [shape: f32[32,32], index: 0, kind: input, shape index: {}]
  %s1 = inlined_call_operand.hbm [shape: f32[66,128], index: 1, kind: input, shape index: {}]
  %s2 = inlined_call_operand.hbm [shape: f32[32,128], index: 2, kind: output, shape index: {}]
  %s3 = sld [smem:[#allocation0]]
  $region26: #{multi_head_attention_fwd.1} parent=0
    _
  %s5 = ssub.s32 1, %s3
  %s6 = scalar_select 0, %s5, %s3
  $region1: #{multi_head_attention_fwd.1} parent=0
    #allocation2 [shape = 'u8[16384]{0}', space=vmem, size = 0x4000, scoped, tag = 'input window, operand 0, single buffered']
    #allocation3 [shape = 's32[1]{0}', space=sflag, size = 0x4, scoped, tag = 'scoped memory for multi_head_attention_fwd.1']
    #allocation4 [shape = 's32[1]{0}', space=sflag, size = 0x4, scoped, tag = 'scoped memory for multi_head_attention_fwd.1']
    #allocation5 [shape = 'u8[36864]{0}', space=vmem, size = 0x9000, scoped, tag = 'input window, operand 1, single buffered']
    #allocation6 [shape = 's32[1]{0}', space=sflag, size = 0x4, scoped, tag = 'scoped memory for multi_head_attention_fwd.1']
    #allocation7 [shape = 'u8[16384]{0}', space=vmem, size = 0x4000, scoped, tag = 'output window, operand 0, single buffered']
    %7 = vsyncpa [#allocation3], 0
    %8 = vsyncpa [#allocation6], 0
    %9 = vsyncpa [#allocation4], 0
    // Predicated region
    $region2: #{multi_head_attention_fwd.1} parent=1 // pred_check
      _
    $region3: #{multi_head_attention_fwd.1} parent=1 // pred_check_branch
      %11 = sbr.rel (0) target = $region5
    $region4: #{multi_head_attention_fwd.1} parent=1 // pred_region
      %s13 = ssub.s32 512, 512
      %14 = vsyncadd [#allocation3], %s13
      %s15 = sshll.u32 [#allocation2], 4
      %s16 = int_to_ptr.vmem [resolvable:$true] %s15
      %21 = dma.hbm_to_vmem [thread:$0]  %s0, 512, %s16, [#allocation3], 128, 128, 8
    $region5: #{multi_head_attention_fwd.1} parent=1 // pred_fallthru
      _
    // Predicated region
    $region6: #{multi_head_attention_fwd.1} parent=1 // pred_check
      _
    $region7: #{multi_head_attention_fwd.1} parent=1 // pred_check_branch
      %23 = sbr.rel (0) target = $region9
    $region8: #{multi_head_attention_fwd.1} parent=1 // pred_region
      %s25 = ssub.s32 1152, 1152
      %26 = vsyncadd [#allocation6], %s25
      %s27 = sshll.u32 [#allocation5], 4
      %s28 = int_to_ptr.vmem [resolvable:$true] %s27
      %33 = dma.hbm_to_vmem [thread:$0]  %s1, 1152, %s28, [#allocation6], 128, 128, 8
    $region9: #{multi_head_attention_fwd.1} parent=1 // pred_fallthru
      _
    // Predicated region
    $region10: #{multi_head_attention_fwd.1} parent=1 // pred_check
      _
    $region11: #{multi_head_attention_fwd.1} parent=1 // pred_check_branch
      %35 = sbr.rel (0) target = $region13
    $region12: #{multi_head_attention_fwd.1} parent=1 // pred_region
      %36 = dma.done [#allocation3], 512
    $region13: #{multi_head_attention_fwd.1} parent=1 // pred_fallthru
      _
    // Predicated region
    $region14: #{multi_head_attention_fwd.1} parent=1 // pred_check
      _
    $region15: #{multi_head_attention_fwd.1} parent=1 // pred_check_branch
      %38 = sbr.rel (0) target = $region17
    $region16: #{multi_head_attention_fwd.1} parent=1 // pred_region
      %39 = dma.done [#allocation6], 1152
    $region17: #{multi_head_attention_fwd.1} parent=1 // pred_fallthru
      _
    %v40 = vld [vmem:[#allocation2] sm:$0xff]
    %v41 = vld [vmem:[#allocation2 + $0x8] sm:$0xff]
    %v42 = vld [vmem:[#allocation2 + $0x10] sm:$0xff]
    %v43 = vld [vmem:[#allocation2 + $0x18] sm:$0xff]
    %v44 = vld [vmem:[#allocation5] sm:$0xff]
    %v45 = vld [vmem:[#allocation5 + $0x8] sm:$0xff]
    %v46 = vld [vmem:[#allocation5 + $0x10] sm:$0xff]
    %v47 = vld [vmem:[#allocation5 + $0x18] sm:$0xff]
    %v48 = vld [vmem:[#allocation5 + $0x20] sm:$0xff]
    %v49 = vld [vmem:[#allocation5 + $0x28] sm:$0xff]
    %v50 = vld [vmem:[#allocation5 + $0x30] sm:$0xff]
    %v51 = vld [vmem:[#allocation5 + $0x38] sm:$0xff]
    %v52 = vld [vmem:[#allocation5 + $0x40] sm:$0x1]
    %v53 = vld [vmem:[#allocation5 + $0x41] sm:$0x1]
    %v54 = vlaneseq
    %v55 = vshrl.u32 %v54, 7
    %v56 = vsub.s32 0, %v55
    %v57 = vrot.slane %v52, %v56
    %vm58 = vcmask 261120
    %v60 = vsel %vm58, %v40, 0
    %v63 = vsel %vm58, %v41, 0
    %v66 = vsel %vm58, %v42, 0
    %v69 = vsel %vm58, %v43, 0
    %71 = vmatprep.subr.mxu0 0.0
    %72 = vmatpush1.msra.mxu0 0.0
    %73 = vmatprep.subr.mxu0 0.0
    %74 = vmatpush1.msra.mxu0 0.0
    %75 = vmatprep.subr.mxu0 0.0
    %76 = vmatpush1.msra.mxu0 0.0
    %77 = vmatprep.subr.mxu0 0.0
    %78 = vmatpush1.msra.mxu0 0.0
    %79 = vmatprep.subr.mxu0 0.0
    %80 = vmatpush1.msra.mxu0 0.0
    %81 = vmatprep.subr.mxu0 0.0
    %82 = vmatpush1.msra.mxu0 0.0
    %83 = vmatprep.subr.mxu0 0.0
    %84 = vmatpush1.msra.mxu0 0.0
    %85 = vmatprep.subr.mxu0 0.0
    %86 = vmatpush1.msra.mxu0 0.0
    %87 = vmatprep.subr.mxu0 0.0
    %88 = vmatpush1.msra.mxu0 0.0
    %89 = vmatprep.subr.mxu0 0.0
    %90 = vmatpush1.msra.mxu0 0.0
    %91 = vmatprep.subr.mxu0 0.0
    %92 = vmatpush1.msra.mxu0 0.0
    %93 = vmatprep.subr.mxu0 0.0
    %94 = vmatpush1.msra.mxu0 0.0
    %95 = vmatprep.subr.mxu0 0.0
    %96 = vmatpush1.msra.mxu0 %v47
    %97 = vmatprep.subr.mxu0 0.0
    %98 = vmatpush1.msra.mxu0 %v46
    %99 = vmatprep.subr.mxu0 0.0
    %100 = vmatpush1.msra.mxu0 %v45
    %101 = vmatprep.subr.mxu0 0.0
    %102 = vmatpush1.msra.mxu0 %v44
    %103 = vmatprep.subr.mxu0 0.0
    %104 = vmatpush2.msra.mxu0 0.0
    %105 = vmatprep.subr.mxu0 0.0
    %106 = vmatpush2.msra.mxu0 0.0
    %107 = vmatprep.subr.mxu0 0.0
    %108 = vmatpush2.msra.mxu0 0.0
    %109 = vmatprep.subr.mxu0 0.0
    %110 = vmatpush2.msra.mxu0 0.0
    %111 = vmatprep.subr.mxu0 0.0
    %112 = vmatpush2.msra.mxu0 0.0
    %113 = vmatprep.subr.mxu0 0.0
    %114 = vmatpush2.msra.mxu0 0.0
    %115 = vmatprep.subr.mxu0 0.0
    %116 = vmatpush2.msra.mxu0 0.0
    %117 = vmatprep.subr.mxu0 0.0
    %118 = vmatpush2.msra.mxu0 0.0
    %119 = vmatprep.subr.mxu0 0.0
    %120 = vmatpush2.msra.mxu0 0.0
    %121 = vmatprep.subr.mxu0 0.0
    %122 = vmatpush2.msra.mxu0 0.0
    %123 = vmatprep.subr.mxu0 0.0
    %124 = vmatpush2.msra.mxu0 0.0
    %125 = vmatprep.subr.mxu0 0.0
    %126 = vmatpush2.msra.mxu0 0.0
    %127 = vmatprep.subr.mxu0 0.0
    %128 = vmatpush2.msra.mxu0 0.0
    %129 = vmatprep.subr.mxu0 0.0
    %130 = vmatpush2.msra.mxu0 0.0
    %131 = vmatprep.subr.mxu0 0.0
    %132 = vmatpush2.msra.mxu0 0.0
    %133 = vmatprep.subr.mxu0 0.0
    %134 = vmatpush2.msra.mxu0 0.0
    %135 = vmatprep.mubr.f32.mxu0 0.0
    %136 = vmatmul.mubr.f32.gmra.mxu0 %v60
    %v137 = vpop.f32.mrf.mxu0
    %v138 = vadd.f32 %v57, %v137
    %v139 = vpop.f32.mrf.mxu0
    %140 = vmatprep.mubr.f32.mxu0 0.0
    %141 = vmatmul.mubr.f32.gmra.mxu0 %v63
    %v142 = vpop.f32.mrf.mxu0
    %v143 = vadd.f32 %v57, %v142
    %v144 = vpop.f32.mrf.mxu0
    %145 = vmatprep.mubr.f32.mxu0 0.0
    %146 = vmatmul.mubr.f32.gmra.mxu0 %v66
    %v147 = vpop.f32.mrf.mxu0
    %v148 = vadd.f32 %v57, %v147
    %v149 = vpop.f32.mrf.mxu0
    %150 = vmatprep.mubr.f32.mxu0 0.0
    %151 = vmatmul.mubr.f32.gmra.mxu0 %v69
    %v152 = vpop.f32.mrf.mxu0
    %v153 = vadd.f32 %v57, %v152
    %v154 = vpop.f32.mrf.mxu0
    %155 = vdwg.mxu0
    %158 = vrot.lane.b32.xlu0 %v138, 96
    %v159 = vpop.permute.xlu0 %158
    %160 = vrot.lane.b32.xlu0 %v143, 96
    %v161 = vpop.permute.xlu0 %160
    %vm162 = vcmask 64512
    %v163 = vsel %vm162, %v138, 0
    %v165 = vsel %vm162, %v143, 0
    %v167 = vsel %vm162, %v159, 0
    %v169 = vsel %vm162, %v161, 0
    %171 = vmatprep.subr.mxu0 0.0
    %172 = vmatpush1.xpose.msra.mxu0 0.0
    %173 = vmatprep.subr.mxu0 0.0
    %174 = vmatpush1.xpose.msra.mxu0 0.0
    %175 = vmatprep.subr.mxu0 0.0
    %176 = vmatpush1.xpose.msra.mxu0 0.0
    %177 = vmatprep.subr.mxu0 0.0
    %178 = vmatpush1.xpose.msra.mxu0 0.0
    %179 = vmatprep.subr.mxu0 0.0
    %180 = vmatpush1.xpose.msra.mxu0 0.0
    %181 = vmatprep.subr.mxu0 0.0
    %182 = vmatpush1.xpose.msra.mxu0 0.0
    %183 = vmatprep.subr.mxu0 0.0
    %184 = vmatpush1.xpose.msra.mxu0 0.0
    %185 = vmatprep.subr.mxu0 0.0
    %186 = vmatpush1.xpose.msra.mxu0 0.0
    %187 = vmatprep.subr.mxu0 0.0
    %188 = vmatpush1.xpose.msra.mxu0 0.0
    %189 = vmatprep.subr.mxu0 0.0
    %190 = vmatpush1.xpose.msra.mxu0 0.0
    %191 = vmatprep.subr.mxu0 0.0
    %192 = vmatpush1.xpose.msra.mxu0 0.0
    %193 = vmatprep.subr.mxu0 0.0
    %194 = vmatpush1.xpose.msra.mxu0 0.0
    %195 = vmatprep.subr.mxu0 0.0
    %196 = vmatpush1.xpose.msra.mxu0 0.0
    %197 = vmatprep.subr.mxu0 0.0
    %198 = vmatpush1.xpose.msra.mxu0 0.0
    %199 = vmatprep.subr.mxu0 0.0
    %200 = vmatpush1.xpose.msra.mxu0 %v169
    %201 = vmatprep.subr.mxu0 0.0
    %202 = vmatpush1.xpose.msra.mxu0 %v167
    %203 = vmatprep.subr.mxu0 0.0
    %204 = vmatpush2.xpose.msra.mxu0 0.0
    %205 = vmatprep.subr.mxu0 0.0
    %206 = vmatpush2.xpose.msra.mxu0 0.0
    %207 = vmatprep.subr.mxu0 0.0
    %208 = vmatpush2.xpose.msra.mxu0 0.0
    %209 = vmatprep.subr.mxu0 0.0
    %210 = vmatpush2.xpose.msra.mxu0 0.0
    %211 = vmatprep.subr.mxu0 0.0
    %212 = vmatpush2.xpose.msra.mxu0 0.0
    %213 = vmatprep.subr.mxu0 0.0
    %214 = vmatpush2.xpose.msra.mxu0 0.0
    %215 = vmatprep.subr.mxu0 0.0
    %216 = vmatpush2.xpose.msra.mxu0 0.0
    %217 = vmatprep.subr.mxu0 0.0
    %218 = vmatpush2.xpose.msra.mxu0 0.0
    %219 = vmatprep.subr.mxu0 0.0
    %220 = vmatpush2.xpose.msra.mxu0 0.0
    %221 = vmatprep.subr.mxu0 0.0
    %222 = vmatpush2.xpose.msra.mxu0 0.0
    %223 = vmatprep.subr.mxu0 0.0
    %224 = vmatpush2.xpose.msra.mxu0 0.0
    %225 = vmatprep.subr.mxu0 0.0
    %226 = vmatpush2.xpose.msra.mxu0 0.0
    %227 = vmatprep.subr.mxu0 0.0
    %228 = vmatpush2.xpose.msra.mxu0 0.0
    %229 = vmatprep.subr.mxu0 0.0
    %230 = vmatpush2.xpose.msra.mxu0 0.0
    %231 = vmatprep.subr.mxu0 0.0
    %232 = vmatpush2.xpose.msra.mxu0 0.0
    %233 = vmatprep.subr.mxu0 0.0
    %234 = vmatpush2.xpose.msra.mxu0 0.0
    %235 = vmatprep.mubr.f32.mxu0 0.0
    %236 = vmatmul.mubr.f32.gmra.mxu0 %v163
    %v237 = vpop.f32.mrf.mxu0
    %v238 = vadd.f32 0.0, %v237
    %v239 = vpop.f32.mrf.mxu0
    %240 = vmatprep.mubr.f32.mxu0 0.0
    %241 = vmatmul.mubr.f32.gmra.mxu0 %v165
    %v242 = vpop.f32.mrf.mxu0
    %v243 = vadd.f32 0.0, %v242
    %v244 = vpop.f32.mrf.mxu0
    %245 = vdwg.mxu0
    %248 = vrot.lane.b32.xlu0 %v148, 96
    %v249 = vpop.permute.xlu0 %248
    %250 = vrot.lane.b32.xlu0 %v153, 96
    %v251 = vpop.permute.xlu0 %250
    %v252 = vsel %vm162, %v148, 0
    %v254 = vsel %vm162, %v153, 0
    %v256 = vsel %vm162, %v249, 0
    %v258 = vsel %vm162, %v251, 0
    %260 = vmatprep.subr.mxu0 0.0
    %261 = vmatpush1.xpose.msra.mxu0 0.0
    %262 = vmatprep.subr.mxu0 0.0
    %263 = vmatpush1.xpose.msra.mxu0 0.0
    %264 = vmatprep.subr.mxu0 0.0
    %265 = vmatpush1.xpose.msra.mxu0 0.0
    %266 = vmatprep.subr.mxu0 0.0
    %267 = vmatpush1.xpose.msra.mxu0 0.0
    %268 = vmatprep.subr.mxu0 0.0
    %269 = vmatpush1.xpose.msra.mxu0 0.0
    %270 = vmatprep.subr.mxu0 0.0
    %271 = vmatpush1.xpose.msra.mxu0 0.0
    %272 = vmatprep.subr.mxu0 0.0
    %273 = vmatpush1.xpose.msra.mxu0 0.0
    %274 = vmatprep.subr.mxu0 0.0
    %275 = vmatpush1.xpose.msra.mxu0 0.0
    %276 = vmatprep.subr.mxu0 0.0
    %277 = vmatpush1.xpose.msra.mxu0 0.0
    %278 = vmatprep.subr.mxu0 0.0
    %279 = vmatpush1.xpose.msra.mxu0 0.0
    %280 = vmatprep.subr.mxu0 0.0
    %281 = vmatpush1.xpose.msra.mxu0 0.0
    %282 = vmatprep.subr.mxu0 0.0
    %283 = vmatpush1.xpose.msra.mxu0 0.0
    %284 = vmatprep.subr.mxu0 0.0
    %285 = vmatpush1.xpose.msra.mxu0 0.0
    %286 = vmatprep.subr.mxu0 0.0
    %287 = vmatpush1.xpose.msra.mxu0 0.0
    %288 = vmatprep.subr.mxu0 0.0
    %289 = vmatpush1.xpose.msra.mxu0 %v258
    %290 = vmatprep.subr.mxu0 0.0
    %291 = vmatpush1.xpose.msra.mxu0 %v256
    %292 = vmatprep.subr.mxu0 0.0
    %293 = vmatpush2.xpose.msra.mxu0 0.0
    %294 = vmatprep.subr.mxu0 0.0
    %295 = vmatpush2.xpose.msra.mxu0 0.0
    %296 = vmatprep.subr.mxu0 0.0
    %297 = vmatpush2.xpose.msra.mxu0 0.0
    %298 = vmatprep.subr.mxu0 0.0
    %299 = vmatpush2.xpose.msra.mxu0 0.0
    %300 = vmatprep.subr.mxu0 0.0
    %301 = vmatpush2.xpose.msra.mxu0 0.0
    %302 = vmatprep.subr.mxu0 0.0
    %303 = vmatpush2.xpose.msra.mxu0 0.0
    %304 = vmatprep.subr.mxu0 0.0
    %305 = vmatpush2.xpose.msra.mxu0 0.0
    %306 = vmatprep.subr.mxu0 0.0
    %307 = vmatpush2.xpose.msra.mxu0 0.0
    %308 = vmatprep.subr.mxu0 0.0
    %309 = vmatpush2.xpose.msra.mxu0 0.0
    %310 = vmatprep.subr.mxu0 0.0
    %311 = vmatpush2.xpose.msra.mxu0 0.0
    %312 = vmatprep.subr.mxu0 0.0
    %313 = vmatpush2.xpose.msra.mxu0 0.0
    %314 = vmatprep.subr.mxu0 0.0
    %315 = vmatpush2.xpose.msra.mxu0 0.0
    %316 = vmatprep.subr.mxu0 0.0
    %317 = vmatpush2.xpose.msra.mxu0 0.0
    %318 = vmatprep.subr.mxu0 0.0
    %319 = vmatpush2.xpose.msra.mxu0 0.0
    %320 = vmatprep.subr.mxu0 0.0
    %321 = vmatpush2.xpose.msra.mxu0 0.0
    %322 = vmatprep.subr.mxu0 0.0
    %323 = vmatpush2.xpose.msra.mxu0 0.0
    %324 = vmatprep.mubr.f32.mxu0 0.0
    %325 = vmatmul.mubr.f32.gmra.mxu0 %v252
    %v326 = vpop.f32.mrf.mxu0
    %v327 = vadd.f32 0.0, %v326
    %v328 = vpop.f32.mrf.mxu0
    %329 = vmatprep.mubr.f32.mxu0 0.0
    %330 = vmatmul.mubr.f32.gmra.mxu0 %v254
    %v331 = vpop.f32.mrf.mxu0
    %v332 = vadd.f32 0.0, %v331
    %v333 = vpop.f32.mrf.mxu0
    %334 = vdwg.mxu0
    %vm335 = vcmask 130048
    %v336 = vsel %vm335, %v238, -inf
    %337 = vmax.xlane.f32.xlu0 %v336
    %v338 = vpop.xlane.xlu0 %337
    %v339 = vsel %vm335, %v243, -inf
    %340 = vmax.xlane.f32.xlu0 %v339
    %v341 = vpop.xlane.xlu0 %340
    %v342 = vsel %vm335, %v327, -inf
    %343 = vmax.xlane.f32.xlu0 %v342
    %v344 = vpop.xlane.xlu0 %343
    %v345 = vsel %vm335, %v332, -inf
    %346 = vmax.xlane.f32.xlu0 %v345
    %v347 = vpop.xlane.xlu0 %346
    %v348 = vsub.f32 %v238, %v338
    %v349 = vsub.f32 %v243, %v341
    %v350 = vsub.f32 %v327, %v344
    %v351 = vsub.f32 %v332, %v347
    %v352 = vmul.f32 %v348, 1.442695
    %v353 = vpow.pop %v352
    %v354 = vmul.f32 %v349, 1.442695
    %v355 = vpow.pop %v354
    %v356 = vmul.f32 %v350, 1.442695
    %v357 = vpow.pop %v356
    %v358 = vmul.f32 %v351, 1.442695
    %v359 = vpow.pop %v358
    %v360 = vsel %vm335, %v353, 0.0
    %361 = vadd.xlane.f32.xlu0 %v360
    %v362 = vpop.xlane.xlu0 %361
    %v363 = vsel %vm335, %v355, 0.0
    %364 = vadd.xlane.f32.xlu0 %v363
    %v365 = vpop.xlane.xlu0 %364
    %v366 = vsel %vm335, %v357, 0.0
    %367 = vadd.xlane.f32.xlu0 %v366
    %v368 = vpop.xlane.xlu0 %367
    %v369 = vsel %vm335, %v359, 0.0
    %370 = vadd.xlane.f32.xlu0 %v369
    %v371 = vpop.xlane.xlu0 %370
    %v372 = vrcp.pop %v362
    %v373 = vrcp.pop %v365
    %v374 = vrcp.pop %v368
    %v375 = vrcp.pop %v371
    %v376 = vmul.f32 %v353, %v372
    %v377 = vmul.f32 %v355, %v373
    %v378 = vmul.f32 %v357, %v374
    %v379 = vmul.f32 %v359, %v375
    %380 = vrot.lane.b32.xlu0 %v138, 64
    %v381 = vpop.permute.xlu0 %380
    %382 = vrot.lane.b32.xlu0 %v143, 64
    %v383 = vpop.permute.xlu0 %382
    %v387 = vsel %vm335, %v376, 0
    %v390 = vsel %vm335, %v377, 0
    %392 = vmatprep.subr.mxu0 0.0
    %393 = vmatpush1.msra.mxu0 0.0
    %394 = vmatprep.subr.mxu0 0.0
    %395 = vmatpush1.msra.mxu0 0.0
    %396 = vmatprep.subr.mxu0 0.0
    %397 = vmatpush1.msra.mxu0 0.0
    %398 = vmatprep.subr.mxu0 0.0
    %399 = vmatpush1.msra.mxu0 0.0
    %400 = vmatprep.subr.mxu0 0.0
    %401 = vmatpush1.msra.mxu0 0.0
    %402 = vmatprep.subr.mxu0 0.0
    %403 = vmatpush1.msra.mxu0 0.0
    %404 = vmatprep.subr.mxu0 0.0
    %405 = vmatpush1.msra.mxu0 0.0
    %406 = vmatprep.subr.mxu0 0.0
    %407 = vmatpush1.msra.mxu0 0.0
    %408 = vmatprep.subr.mxu0 0.0
    %409 = vmatpush1.msra.mxu0 0.0
    %410 = vmatprep.subr.mxu0 0.0
    %411 = vmatpush1.msra.mxu0 0.0
    %412 = vmatprep.subr.mxu0 0.0
    %413 = vmatpush1.msra.mxu0 0.0
    %414 = vmatprep.subr.mxu0 0.0
    %415 = vmatpush1.msra.mxu0 0.0
    %416 = vmatprep.subr.mxu0 0.0
    %417 = vmatpush1.msra.mxu0 0.0
    %418 = vmatprep.subr.mxu0 0.0
    %419 = vmatpush1.msra.mxu0 0.0
    %420 = vmatprep.subr.mxu0 0.0
    %421 = vmatpush1.msra.mxu0 %v383
    %422 = vmatprep.subr.mxu0 0.0
    %423 = vmatpush1.msra.mxu0 %v381
    %424 = vmatprep.subr.mxu0 0.0
    %425 = vmatpush2.msra.mxu0 0.0
    %426 = vmatprep.subr.mxu0 0.0
    %427 = vmatpush2.msra.mxu0 0.0
    %428 = vmatprep.subr.mxu0 0.0
    %429 = vmatpush2.msra.mxu0 0.0
    %430 = vmatprep.subr.mxu0 0.0
    %431 = vmatpush2.msra.mxu0 0.0
    %432 = vmatprep.subr.mxu0 0.0
    %433 = vmatpush2.msra.mxu0 0.0
    %434 = vmatprep.subr.mxu0 0.0
    %435 = vmatpush2.msra.mxu0 0.0
    %436 = vmatprep.subr.mxu0 0.0
    %437 = vmatpush2.msra.mxu0 0.0
    %438 = vmatprep.subr.mxu0 0.0
    %439 = vmatpush2.msra.mxu0 0.0
    %440 = vmatprep.subr.mxu0 0.0
    %441 = vmatpush2.msra.mxu0 0.0
    %442 = vmatprep.subr.mxu0 0.0
    %443 = vmatpush2.msra.mxu0 0.0
    %444 = vmatprep.subr.mxu0 0.0
    %445 = vmatpush2.msra.mxu0 0.0
    %446 = vmatprep.subr.mxu0 0.0
    %447 = vmatpush2.msra.mxu0 0.0
    %448 = vmatprep.subr.mxu0 0.0
    %449 = vmatpush2.msra.mxu0 0.0
    %450 = vmatprep.subr.mxu0 0.0
    %451 = vmatpush2.msra.mxu0 0.0
    %452 = vmatprep.subr.mxu0 0.0
    %453 = vmatpush2.msra.mxu0 0.0
    %454 = vmatprep.subr.mxu0 0.0
    %455 = vmatpush2.msra.mxu0 0.0
    %456 = vmatprep.mubr.f32.mxu0 0.0
    %457 = vmatmul.mubr.f32.gmra.mxu0 %v387
    %v458 = vpop.f32.mrf.mxu0
    %v459 = vadd.f32 0.0, %v458
    %v460 = vpop.f32.mrf.mxu0
    %461 = vmatprep.mubr.f32.mxu0 0.0
    %462 = vmatmul.mubr.f32.gmra.mxu0 %v390
    %v463 = vpop.f32.mrf.mxu0
    %v464 = vadd.f32 0.0, %v463
    %v465 = vpop.f32.mrf.mxu0
    %466 = vdwg.mxu0
    %467 = vrot.lane.b32.xlu0 %v148, 64
    %v468 = vpop.permute.xlu0 %467
    %469 = vrot.lane.b32.xlu0 %v153, 64
    %v470 = vpop.permute.xlu0 %469
    %v474 = vsel %vm335, %v378, 0
    %v477 = vsel %vm335, %v379, 0
    %479 = vmatprep.subr.mxu0 0.0
    %480 = vmatpush1.msra.mxu0 0.0
    %481 = vmatprep.subr.mxu0 0.0
    %482 = vmatpush1.msra.mxu0 0.0
    %483 = vmatprep.subr.mxu0 0.0
    %484 = vmatpush1.msra.mxu0 0.0
    %485 = vmatprep.subr.mxu0 0.0
    %486 = vmatpush1.msra.mxu0 0.0
    %487 = vmatprep.subr.mxu0 0.0
    %488 = vmatpush1.msra.mxu0 0.0
    %489 = vmatprep.subr.mxu0 0.0
    %490 = vmatpush1.msra.mxu0 0.0
    %491 = vmatprep.subr.mxu0 0.0
    %492 = vmatpush1.msra.mxu0 0.0
    %493 = vmatprep.subr.mxu0 0.0
    %494 = vmatpush1.msra.mxu0 0.0
    %495 = vmatprep.subr.mxu0 0.0
    %496 = vmatpush1.msra.mxu0 0.0
    %497 = vmatprep.subr.mxu0 0.0
    %498 = vmatpush1.msra.mxu0 0.0
    %499 = vmatprep.subr.mxu0 0.0
    %500 = vmatpush1.msra.mxu0 0.0
    %501 = vmatprep.subr.mxu0 0.0
    %502 = vmatpush1.msra.mxu0 0.0
    %503 = vmatprep.subr.mxu0 0.0
    %504 = vmatpush1.msra.mxu0 0.0
    %505 = vmatprep.subr.mxu0 0.0
    %506 = vmatpush1.msra.mxu0 0.0
    %507 = vmatprep.subr.mxu0 0.0
    %508 = vmatpush1.msra.mxu0 %v470
    %509 = vmatprep.subr.mxu0 0.0
    %510 = vmatpush1.msra.mxu0 %v468
    %511 = vmatprep.subr.mxu0 0.0
    %512 = vmatpush2.msra.mxu0 0.0
    %513 = vmatprep.subr.mxu0 0.0
    %514 = vmatpush2.msra.mxu0 0.0
    %515 = vmatprep.subr.mxu0 0.0
    %516 = vmatpush2.msra.mxu0 0.0
    %517 = vmatprep.subr.mxu0 0.0
    %518 = vmatpush2.msra.mxu0 0.0
    %519 = vmatprep.subr.mxu0 0.0
    %520 = vmatpush2.msra.mxu0 0.0
    %521 = vmatprep.subr.mxu0 0.0
    %522 = vmatpush2.msra.mxu0 0.0
    %523 = vmatprep.subr.mxu0 0.0
    %524 = vmatpush2.msra.mxu0 0.0
    %525 = vmatprep.subr.mxu0 0.0
    %526 = vmatpush2.msra.mxu0 0.0
    %527 = vmatprep.subr.mxu0 0.0
    %528 = vmatpush2.msra.mxu0 0.0
    %529 = vmatprep.subr.mxu0 0.0
    %530 = vmatpush2.msra.mxu0 0.0
    %531 = vmatprep.subr.mxu0 0.0
    %532 = vmatpush2.msra.mxu0 0.0
    %533 = vmatprep.subr.mxu0 0.0
    %534 = vmatpush2.msra.mxu0 0.0
    %535 = vmatprep.subr.mxu0 0.0
    %536 = vmatpush2.msra.mxu0 0.0
    %537 = vmatprep.subr.mxu0 0.0
    %538 = vmatpush2.msra.mxu0 0.0
    %539 = vmatprep.subr.mxu0 0.0
    %540 = vmatpush2.msra.mxu0 0.0
    %541 = vmatprep.subr.mxu0 0.0
    %542 = vmatpush2.msra.mxu0 0.0
    %543 = vmatprep.mubr.f32.mxu0 0.0
    %544 = vmatmul.mubr.f32.gmra.mxu0 %v474
    %v545 = vpop.f32.mrf.mxu0
    %v546 = vadd.f32 0.0, %v545
    %v547 = vpop.f32.mrf.mxu0
    %548 = vmatprep.mubr.f32.mxu0 0.0
    %549 = vmatmul.mubr.f32.gmra.mxu0 %v477
    %v550 = vpop.f32.mrf.mxu0
    %v551 = vadd.f32 0.0, %v550
    %v552 = vpop.f32.mrf.mxu0
    %553 = vdwg.mxu0
    %554 = vrot.lane.b32.xlu0 %v138, 120
    %v555 = vpop.permute.xlu0 %554
    %556 = vrot.lane.b32.xlu0 %v143, 120
    %v557 = vpop.permute.xlu0 %556
    %558 = vrot.lane.b32.xlu0 %v138, 88
    %v559 = vpop.permute.xlu0 %558
    %560 = vrot.lane.b32.xlu0 %v143, 88
    %v561 = vpop.permute.xlu0 %560
    %v562 = vsel %vm162, %v555, 0
    %v564 = vsel %vm162, %v557, 0
    %v566 = vsel %vm162, %v559, 0
    %v568 = vsel %vm162, %v561, 0
    %570 = vmatprep.subr.mxu0 0.0
    %571 = vmatpush1.xpose.msra.mxu0 0.0
    %572 = vmatprep.subr.mxu0 0.0
    %573 = vmatpush1.xpose.msra.mxu0 0.0
    %574 = vmatprep.subr.mxu0 0.0
    %575 = vmatpush1.xpose.msra.mxu0 0.0
    %576 = vmatprep.subr.mxu0 0.0
    %577 = vmatpush1.xpose.msra.mxu0 0.0
    %578 = vmatprep.subr.mxu0 0.0
    %579 = vmatpush1.xpose.msra.mxu0 0.0
    %580 = vmatprep.subr.mxu0 0.0
    %581 = vmatpush1.xpose.msra.mxu0 0.0
    %582 = vmatprep.subr.mxu0 0.0
    %583 = vmatpush1.xpose.msra.mxu0 0.0
    %584 = vmatprep.subr.mxu0 0.0
    %585 = vmatpush1.xpose.msra.mxu0 0.0
    %586 = vmatprep.subr.mxu0 0.0
    %587 = vmatpush1.xpose.msra.mxu0 0.0
    %588 = vmatprep.subr.mxu0 0.0
    %589 = vmatpush1.xpose.msra.mxu0 0.0
    %590 = vmatprep.subr.mxu0 0.0
    %591 = vmatpush1.xpose.msra.mxu0 0.0
    %592 = vmatprep.subr.mxu0 0.0
    %593 = vmatpush1.xpose.msra.mxu0 0.0
    %594 = vmatprep.subr.mxu0 0.0
    %595 = vmatpush1.xpose.msra.mxu0 0.0
    %596 = vmatprep.subr.mxu0 0.0
    %597 = vmatpush1.xpose.msra.mxu0 0.0
    %598 = vmatprep.subr.mxu0 0.0
    %599 = vmatpush1.xpose.msra.mxu0 %v568
    %600 = vmatprep.subr.mxu0 0.0
    %601 = vmatpush1.xpose.msra.mxu0 %v566
    %602 = vmatprep.subr.mxu0 0.0
    %603 = vmatpush2.xpose.msra.mxu0 0.0
    %604 = vmatprep.subr.mxu0 0.0
    %605 = vmatpush2.xpose.msra.mxu0 0.0
    %606 = vmatprep.subr.mxu0 0.0
    %607 = vmatpush2.xpose.msra.mxu0 0.0
    %608 = vmatprep.subr.mxu0 0.0
    %609 = vmatpush2.xpose.msra.mxu0 0.0
    %610 = vmatprep.subr.mxu0 0.0
    %611 = vmatpush2.xpose.msra.mxu0 0.0
    %612 = vmatprep.subr.mxu0 0.0
    %613 = vmatpush2.xpose.msra.mxu0 0.0
    %614 = vmatprep.subr.mxu0 0.0
    %615 = vmatpush2.xpose.msra.mxu0 0.0
    %616 = vmatprep.subr.mxu0 0.0
    %617 = vmatpush2.xpose.msra.mxu0 0.0
    %618 = vmatprep.subr.mxu0 0.0
    %619 = vmatpush2.xpose.msra.mxu0 0.0
    %620 = vmatprep.subr.mxu0 0.0
    %621 = vmatpush2.xpose.msra.mxu0 0.0
    %622 = vmatprep.subr.mxu0 0.0
    %623 = vmatpush2.xpose.msra.mxu0 0.0
    %624 = vmatprep.subr.mxu0 0.0
    %625 = vmatpush2.xpose.msra.mxu0 0.0
    %626 = vmatprep.subr.mxu0 0.0
    %627 = vmatpush2.xpose.msra.mxu0 0.0
    %628 = vmatprep.subr.mxu0 0.0
    %629 = vmatpush2.xpose.msra.mxu0 0.0
    %630 = vmatprep.subr.mxu0 0.0
    %631 = vmatpush2.xpose.msra.mxu0 0.0
    %632 = vmatprep.subr.mxu0 0.0
    %633 = vmatpush2.xpose.msra.mxu0 0.0
    %634 = vmatprep.mubr.f32.mxu0 0.0
    %635 = vmatmul.mubr.f32.gmra.mxu0 %v562
    %v636 = vpop.f32.mrf.mxu0
    %v637 = vadd.f32 0.0, %v636
    %v638 = vpop.f32.mrf.mxu0
    %639 = vmatprep.mubr.f32.mxu0 0.0
    %640 = vmatmul.mubr.f32.gmra.mxu0 %v564
    %v641 = vpop.f32.mrf.mxu0
    %v642 = vadd.f32 0.0, %v641
    %v643 = vpop.f32.mrf.mxu0
    %644 = vdwg.mxu0
    %645 = vrot.lane.b32.xlu0 %v148, 120
    %v646 = vpop.permute.xlu0 %645
    %647 = vrot.lane.b32.xlu0 %v153, 120
    %v648 = vpop.permute.xlu0 %647
    %649 = vrot.lane.b32.xlu0 %v148, 88
    %v650 = vpop.permute.xlu0 %649
    %651 = vrot.lane.b32.xlu0 %v153, 88
    %v652 = vpop.permute.xlu0 %651
    %v653 = vsel %vm162, %v646, 0
    %v655 = vsel %vm162, %v648, 0
    %v657 = vsel %vm162, %v650, 0
    %v659 = vsel %vm162, %v652, 0
    %661 = vmatprep.subr.mxu0 0.0
    %662 = vmatpush1.xpose.msra.mxu0 0.0
    %663 = vmatprep.subr.mxu0 0.0
    %664 = vmatpush1.xpose.msra.mxu0 0.0
    %665 = vmatprep.subr.mxu0 0.0
    %666 = vmatpush1.xpose.msra.mxu0 0.0
    %667 = vmatprep.subr.mxu0 0.0
    %668 = vmatpush1.xpose.msra.mxu0 0.0
    %669 = vmatprep.subr.mxu0 0.0
    %670 = vmatpush1.xpose.msra.mxu0 0.0
    %671 = vmatprep.subr.mxu0 0.0
    %672 = vmatpush1.xpose.msra.mxu0 0.0
    %673 = vmatprep.subr.mxu0 0.0
    %674 = vmatpush1.xpose.msra.mxu0 0.0
    %675 = vmatprep.subr.mxu0 0.0
    %676 = vmatpush1.xpose.msra.mxu0 0.0
    %677 = vmatprep.subr.mxu0 0.0
    %678 = vmatpush1.xpose.msra.mxu0 0.0
    %679 = vmatprep.subr.mxu0 0.0
    %680 = vmatpush1.xpose.msra.mxu0 0.0
    %681 = vmatprep.subr.mxu0 0.0
    %682 = vmatpush1.xpose.msra.mxu0 0.0
    %683 = vmatprep.subr.mxu0 0.0
    %684 = vmatpush1.xpose.msra.mxu0 0.0
    %685 = vmatprep.subr.mxu0 0.0
    %686 = vmatpush1.xpose.msra.mxu0 0.0
    %687 = vmatprep.subr.mxu0 0.0
    %688 = vmatpush1.xpose.msra.mxu0 0.0
    %689 = vmatprep.subr.mxu0 0.0
    %690 = vmatpush1.xpose.msra.mxu0 %v659
    %691 = vmatprep.subr.mxu0 0.0
    %692 = vmatpush1.xpose.msra.mxu0 %v657
    %693 = vmatprep.subr.mxu0 0.0
    %694 = vmatpush2.xpose.msra.mxu0 0.0
    %695 = vmatprep.subr.mxu0 0.0
    %696 = vmatpush2.xpose.msra.mxu0 0.0
    %697 = vmatprep.subr.mxu0 0.0
    %698 = vmatpush2.xpose.msra.mxu0 0.0
    %699 = vmatprep.subr.mxu0 0.0
    %700 = vmatpush2.xpose.msra.mxu0 0.0
    %701 = vmatprep.subr.mxu0 0.0
    %702 = vmatpush2.xpose.msra.mxu0 0.0
    %703 = vmatprep.subr.mxu0 0.0
    %704 = vmatpush2.xpose.msra.mxu0 0.0
    %705 = vmatprep.subr.mxu0 0.0
    %706 = vmatpush2.xpose.msra.mxu0 0.0
    %707 = vmatprep.subr.mxu0 0.0
    %708 = vmatpush2.xpose.msra.mxu0 0.0
    %709 = vmatprep.subr.mxu0 0.0
    %710 = vmatpush2.xpose.msra.mxu0 0.0
    %711 = vmatprep.subr.mxu0 0.0
    %712 = vmatpush2.xpose.msra.mxu0 0.0
    %713 = vmatprep.subr.mxu0 0.0
    %714 = vmatpush2.xpose.msra.mxu0 0.0
    %715 = vmatprep.subr.mxu0 0.0
    %716 = vmatpush2.xpose.msra.mxu0 0.0
    %717 = vmatprep.subr.mxu0 0.0
    %718 = vmatpush2.xpose.msra.mxu0 0.0
    %719 = vmatprep.subr.mxu0 0.0
    %720 = vmatpush2.xpose.msra.mxu0 0.0
    %721 = vmatprep.subr.mxu0 0.0
    %722 = vmatpush2.xpose.msra.mxu0 0.0
    %723 = vmatprep.subr.mxu0 0.0
    %724 = vmatpush2.xpose.msra.mxu0 0.0
    %725 = vmatprep.mubr.f32.mxu0 0.0
    %726 = vmatmul.mubr.f32.gmra.mxu0 %v653
    %v727 = vpop.f32.mrf.mxu0
    %v728 = vadd.f32 0.0, %v727
    %v729 = vpop.f32.mrf.mxu0
    %730 = vmatprep.mubr.f32.mxu0 0.0
    %731 = vmatmul.mubr.f32.gmra.mxu0 %v655
    %v732 = vpop.f32.mrf.mxu0
    %v733 = vadd.f32 0.0, %v732
    %v734 = vpop.f32.mrf.mxu0
    %735 = vdwg.mxu0
    %v736 = vsel %vm335, %v637, -inf
    %737 = vmax.xlane.f32.xlu0 %v736
    %v738 = vpop.xlane.xlu0 %737
    %v739 = vsel %vm335, %v642, -inf
    %740 = vmax.xlane.f32.xlu0 %v739
    %v741 = vpop.xlane.xlu0 %740
    %v742 = vsel %vm335, %v728, -inf
    %743 = vmax.xlane.f32.xlu0 %v742
    %v744 = vpop.xlane.xlu0 %743
    %v745 = vsel %vm335, %v733, -inf
    %746 = vmax.xlane.f32.xlu0 %v745
    %v747 = vpop.xlane.xlu0 %746
    %v748 = vsub.f32 %v637, %v738
    %v749 = vsub.f32 %v642, %v741
    %v750 = vsub.f32 %v728, %v744
    %v751 = vsub.f32 %v733, %v747
    %v752 = vmul.f32 %v748, 1.442695
    %v753 = vpow.pop %v752
    %v754 = vmul.f32 %v749, 1.442695
    %v755 = vpow.pop %v754
    %v756 = vmul.f32 %v750, 1.442695
    %v757 = vpow.pop %v756
    %v758 = vmul.f32 %v751, 1.442695
    %v759 = vpow.pop %v758
    %v760 = vsel %vm335, %v753, 0.0
    %761 = vadd.xlane.f32.xlu0 %v760
    %v762 = vpop.xlane.xlu0 %761
    %v763 = vsel %vm335, %v755, 0.0
    %764 = vadd.xlane.f32.xlu0 %v763
    %v765 = vpop.xlane.xlu0 %764
    %v766 = vsel %vm335, %v757, 0.0
    %767 = vadd.xlane.f32.xlu0 %v766
    %v768 = vpop.xlane.xlu0 %767
    %v769 = vsel %vm335, %v759, 0.0
    %770 = vadd.xlane.f32.xlu0 %v769
    %v771 = vpop.xlane.xlu0 %770
    %v772 = vrcp.pop %v762
    %v773 = vrcp.pop %v765
    %v774 = vrcp.pop %v768
    %v775 = vrcp.pop %v771
    %v776 = vmul.f32 %v753, %v772
    %v777 = vmul.f32 %v755, %v773
    %v778 = vmul.f32 %v757, %v774
    %v779 = vmul.f32 %v759, %v775
    %780 = vrot.lane.b32.xlu0 %v138, 56
    %v781 = vpop.permute.xlu0 %780
    %782 = vrot.lane.b32.xlu0 %v143, 56
    %v783 = vpop.permute.xlu0 %782
    %v787 = vsel %vm335, %v776, 0
    %v790 = vsel %vm335, %v777, 0
    %792 = vmatprep.subr.mxu0 0.0
    %793 = vmatpush1.msra.mxu0 0.0
    %794 = vmatprep.subr.mxu0 0.0
    %795 = vmatpush1.msra.mxu0 0.0
    %796 = vmatprep.subr.mxu0 0.0
    %797 = vmatpush1.msra.mxu0 0.0
    %798 = vmatprep.subr.mxu0 0.0
    %799 = vmatpush1.msra.mxu0 0.0
    %800 = vmatprep.subr.mxu0 0.0
    %801 = vmatpush1.msra.mxu0 0.0
    %802 = vmatprep.subr.mxu0 0.0
    %803 = vmatpush1.msra.mxu0 0.0
    %804 = vmatprep.subr.mxu0 0.0
    %805 = vmatpush1.msra.mxu0 0.0
    %806 = vmatprep.subr.mxu0 0.0
    %807 = vmatpush1.msra.mxu0 0.0
    %808 = vmatprep.subr.mxu0 0.0
    %809 = vmatpush1.msra.mxu0 0.0
    %810 = vmatprep.subr.mxu0 0.0
    %811 = vmatpush1.msra.mxu0 0.0
    %812 = vmatprep.subr.mxu0 0.0
    %813 = vmatpush1.msra.mxu0 0.0
    %814 = vmatprep.subr.mxu0 0.0
    %815 = vmatpush1.msra.mxu0 0.0
    %816 = vmatprep.subr.mxu0 0.0
    %817 = vmatpush1.msra.mxu0 0.0
    %818 = vmatprep.subr.mxu0 0.0
    %819 = vmatpush1.msra.mxu0 0.0
    %820 = vmatprep.subr.mxu0 0.0
    %821 = vmatpush1.msra.mxu0 %v783
    %822 = vmatprep.subr.mxu0 0.0
    %823 = vmatpush1.msra.mxu0 %v781
    %824 = vmatprep.subr.mxu0 0.0
    %825 = vmatpush2.msra.mxu0 0.0
    %826 = vmatprep.subr.mxu0 0.0
    %827 = vmatpush2.msra.mxu0 0.0
    %828 = vmatprep.subr.mxu0 0.0
    %829 = vmatpush2.msra.mxu0 0.0
    %830 = vmatprep.subr.mxu0 0.0
    %831 = vmatpush2.msra.mxu0 0.0
    %832 = vmatprep.subr.mxu0 0.0
    %833 = vmatpush2.msra.mxu0 0.0
    %834 = vmatprep.subr.mxu0 0.0
    %835 = vmatpush2.msra.mxu0 0.0
    %836 = vmatprep.subr.mxu0 0.0
    %837 = vmatpush2.msra.mxu0 0.0
    %838 = vmatprep.subr.mxu0 0.0
    %839 = vmatpush2.msra.mxu0 0.0
    %840 = vmatprep.subr.mxu0 0.0
    %841 = vmatpush2.msra.mxu0 0.0
    %842 = vmatprep.subr.mxu0 0.0
    %843 = vmatpush2.msra.mxu0 0.0
    %844 = vmatprep.subr.mxu0 0.0
    %845 = vmatpush2.msra.mxu0 0.0
    %846 = vmatprep.subr.mxu0 0.0
    %847 = vmatpush2.msra.mxu0 0.0
    %848 = vmatprep.subr.mxu0 0.0
    %849 = vmatpush2.msra.mxu0 0.0
    %850 = vmatprep.subr.mxu0 0.0
    %851 = vmatpush2.msra.mxu0 0.0
    %852 = vmatprep.subr.mxu0 0.0
    %853 = vmatpush2.msra.mxu0 0.0
    %854 = vmatprep.subr.mxu0 0.0
    %855 = vmatpush2.msra.mxu0 0.0
    %856 = vmatprep.mubr.f32.mxu0 0.0
    %857 = vmatmul.mubr.f32.gmra.mxu0 %v787
    %v858 = vpop.f32.mrf.mxu0
    %v859 = vadd.f32 0.0, %v858
    %v860 = vpop.f32.mrf.mxu0
    %861 = vmatprep.mubr.f32.mxu0 0.0
    %862 = vmatmul.mubr.f32.gmra.mxu0 %v790
    %v863 = vpop.f32.mrf.mxu0
    %v864 = vadd.f32 0.0, %v863
    %v865 = vpop.f32.mrf.mxu0
    %866 = vdwg.mxu0
    %867 = vrot.lane.b32.xlu0 %v148, 56
    %v868 = vpop.permute.xlu0 %867
    %869 = vrot.lane.b32.xlu0 %v153, 56
    %v870 = vpop.permute.xlu0 %869
    %v874 = vsel %vm335, %v778, 0
    %v877 = vsel %vm335, %v779, 0
    %879 = vmatprep.subr.mxu0 0.0
    %880 = vmatpush1.msra.mxu0 0.0
    %881 = vmatprep.subr.mxu0 0.0
    %882 = vmatpush1.msra.mxu0 0.0
    %883 = vmatprep.subr.mxu0 0.0
    %884 = vmatpush1.msra.mxu0 0.0
    %885 = vmatprep.subr.mxu0 0.0
    %886 = vmatpush1.msra.mxu0 0.0
    %887 = vmatprep.subr.mxu0 0.0
    %888 = vmatpush1.msra.mxu0 0.0
    %889 = vmatprep.subr.mxu0 0.0
    %890 = vmatpush1.msra.mxu0 0.0
    %891 = vmatprep.subr.mxu0 0.0
    %892 = vmatpush1.msra.mxu0 0.0
    %893 = vmatprep.subr.mxu0 0.0
    %894 = vmatpush1.msra.mxu0 0.0
    %895 = vmatprep.subr.mxu0 0.0
    %896 = vmatpush1.msra.mxu0 0.0
    %897 = vmatprep.subr.mxu0 0.0
    %898 = vmatpush1.msra.mxu0 0.0
    %899 = vmatprep.subr.mxu0 0.0
    %900 = vmatpush1.msra.mxu0 0.0
    %901 = vmatprep.subr.mxu0 0.0
    %902 = vmatpush1.msra.mxu0 0.0
    %903 = vmatprep.subr.mxu0 0.0
    %904 = vmatpush1.msra.mxu0 0.0
    %905 = vmatprep.subr.mxu0 0.0
    %906 = vmatpush1.msra.mxu0 0.0
    %907 = vmatprep.subr.mxu0 0.0
    %908 = vmatpush1.msra.mxu0 %v870
    %909 = vmatprep.subr.mxu0 0.0
    %910 = vmatpush1.msra.mxu0 %v868
    %911 = vmatprep.subr.mxu0 0.0
    %912 = vmatpush2.msra.mxu0 0.0
    %913 = vmatprep.subr.mxu0 0.0
    %914 = vmatpush2.msra.mxu0 0.0
    %915 = vmatprep.subr.mxu0 0.0
    %916 = vmatpush2.msra.mxu0 0.0
    %917 = vmatprep.subr.mxu0 0.0
    %918 = vmatpush2.msra.mxu0 0.0
    %919 = vmatprep.subr.mxu0 0.0
    %920 = vmatpush2.msra.mxu0 0.0
    %921 = vmatprep.subr.mxu0 0.0
    %922 = vmatpush2.msra.mxu0 0.0
    %923 = vmatprep.subr.mxu0 0.0
    %924 = vmatpush2.msra.mxu0 0.0
    %925 = vmatprep.subr.mxu0 0.0
    %926 = vmatpush2.msra.mxu0 0.0
    %927 = vmatprep.subr.mxu0 0.0
    %928 = vmatpush2.msra.mxu0 0.0
    %929 = vmatprep.subr.mxu0 0.0
    %930 = vmatpush2.msra.mxu0 0.0
    %931 = vmatprep.subr.mxu0 0.0
    %932 = vmatpush2.msra.mxu0 0.0
    %933 = vmatprep.subr.mxu0 0.0
    %934 = vmatpush2.msra.mxu0 0.0
    %935 = vmatprep.subr.mxu0 0.0
    %936 = vmatpush2.msra.mxu0 0.0
    %937 = vmatprep.subr.mxu0 0.0
    %938 = vmatpush2.msra.mxu0 0.0
    %939 = vmatprep.subr.mxu0 0.0
    %940 = vmatpush2.msra.mxu0 0.0
    %941 = vmatprep.subr.mxu0 0.0
    %942 = vmatpush2.msra.mxu0 0.0
    %943 = vmatprep.mubr.f32.mxu0 0.0
    %944 = vmatmul.mubr.f32.gmra.mxu0 %v874
    %v945 = vpop.f32.mrf.mxu0
    %v946 = vadd.f32 0.0, %v945
    %v947 = vpop.f32.mrf.mxu0
    %948 = vmatprep.mubr.f32.mxu0 0.0
    %949 = vmatmul.mubr.f32.gmra.mxu0 %v877
    %v950 = vpop.f32.mrf.mxu0
    %v951 = vadd.f32 0.0, %v950
    %v952 = vpop.f32.mrf.mxu0
    %953 = vdwg.mxu0
    %954 = vrot.lane.b32.xlu0 %v138, 112
    %v955 = vpop.permute.xlu0 %954
    %956 = vrot.lane.b32.xlu0 %v143, 112
    %v957 = vpop.permute.xlu0 %956
    %958 = vrot.lane.b32.xlu0 %v138, 80
    %v959 = vpop.permute.xlu0 %958
    %960 = vrot.lane.b32.xlu0 %v143, 80
    %v961 = vpop.permute.xlu0 %960
    %v962 = vsel %vm162, %v955, 0
    %v964 = vsel %vm162, %v957, 0
    %v966 = vsel %vm162, %v959, 0
    %v968 = vsel %vm162, %v961, 0
    %970 = vmatprep.subr.mxu0 0.0
    %971 = vmatpush1.xpose.msra.mxu0 0.0
    %972 = vmatprep.subr.mxu0 0.0
    %973 = vmatpush1.xpose.msra.mxu0 0.0
    %974 = vmatprep.subr.mxu0 0.0
    %975 = vmatpush1.xpose.msra.mxu0 0.0
    %976 = vmatprep.subr.mxu0 0.0
    %977 = vmatpush1.xpose.msra.mxu0 0.0
    %978 = vmatprep.subr.mxu0 0.0
    %979 = vmatpush1.xpose.msra.mxu0 0.0
    %980 = vmatprep.subr.mxu0 0.0
    %981 = vmatpush1.xpose.msra.mxu0 0.0
    %982 = vmatprep.subr.mxu0 0.0
    %983 = vmatpush1.xpose.msra.mxu0 0.0
    %984 = vmatprep.subr.mxu0 0.0
    %985 = vmatpush1.xpose.msra.mxu0 0.0
    %986 = vmatprep.subr.mxu0 0.0
    %987 = vmatpush1.xpose.msra.mxu0 0.0
    %988 = vmatprep.subr.mxu0 0.0
    %989 = vmatpush1.xpose.msra.mxu0 0.0
    %990 = vmatprep.subr.mxu0 0.0
    %991 = vmatpush1.xpose.msra.mxu0 0.0
    %992 = vmatprep.subr.mxu0 0.0
    %993 = vmatpush1.xpose.msra.mxu0 0.0
    %994 = vmatprep.subr.mxu0 0.0
    %995 = vmatpush1.xpose.msra.mxu0 0.0
    %996 = vmatprep.subr.mxu0 0.0
    %997 = vmatpush1.xpose.msra.mxu0 0.0
    %998 = vmatprep.subr.mxu0 0.0
    %999 = vmatpush1.xpose.msra.mxu0 %v968
    %1000 = vmatprep.subr.mxu0 0.0
    %1001 = vmatpush1.xpose.msra.mxu0 %v966
    %1002 = vmatprep.subr.mxu0 0.0
    %1003 = vmatpush2.xpose.msra.mxu0 0.0
    %1004 = vmatprep.subr.mxu0 0.0
    %1005 = vmatpush2.xpose.msra.mxu0 0.0
    %1006 = vmatprep.subr.mxu0 0.0
    %1007 = vmatpush2.xpose.msra.mxu0 0.0
    %1008 = vmatprep.subr.mxu0 0.0
    %1009 = vmatpush2.xpose.msra.mxu0 0.0
    %1010 = vmatprep.subr.mxu0 0.0
    %1011 = vmatpush2.xpose.msra.mxu0 0.0
    %1012 = vmatprep.subr.mxu0 0.0
    %1013 = vmatpush2.xpose.msra.mxu0 0.0
    %1014 = vmatprep.subr.mxu0 0.0
    %1015 = vmatpush2.xpose.msra.mxu0 0.0
    %1016 = vmatprep.subr.mxu0 0.0
    %1017 = vmatpush2.xpose.msra.mxu0 0.0
    %1018 = vmatprep.subr.mxu0 0.0
    %1019 = vmatpush2.xpose.msra.mxu0 0.0
    %1020 = vmatprep.subr.mxu0 0.0
    %1021 = vmatpush2.xpose.msra.mxu0 0.0
    %1022 = vmatprep.subr.mxu0 0.0
    %1023 = vmatpush2.xpose.msra.mxu0 0.0
    %1024 = vmatprep.subr.mxu0 0.0
    %1025 = vmatpush2.xpose.msra.mxu0 0.0
    %1026 = vmatprep.subr.mxu0 0.0
    %1027 = vmatpush2.xpose.msra.mxu0 0.0
    %1028 = vmatprep.subr.mxu0 0.0
    %1029 = vmatpush2.xpose.msra.mxu0 0.0
    %1030 = vmatprep.subr.mxu0 0.0
    %1031 = vmatpush2.xpose.msra.mxu0 0.0
    %1032 = vmatprep.subr.mxu0 0.0
    %1033 = vmatpush2.xpose.msra.mxu0 0.0
    %1034 = vmatprep.mubr.f32.mxu0 0.0
    %1035 = vmatmul.mubr.f32.gmra.mxu0 %v962
    %v1036 = vpop.f32.mrf.mxu0
    %v1037 = vadd.f32 0.0, %v1036
    %v1038 = vpop.f32.mrf.mxu0
    %1039 = vmatprep.mubr.f32.mxu0 0.0
    %1040 = vmatmul.mubr.f32.gmra.mxu0 %v964
    %v1041 = vpop.f32.mrf.mxu0
    %v1042 = vadd.f32 0.0, %v1041
    %v1043 = vpop.f32.mrf.mxu0
    %1044 = vdwg.mxu0
    %1045 = vrot.lane.b32.xlu0 %v148, 112
    %v1046 = vpop.permute.xlu0 %1045
    %1047 = vrot.lane.b32.xlu0 %v153, 112
    %v1048 = vpop.permute.xlu0 %1047
    %1049 = vrot.lane.b32.xlu0 %v148, 80
    %v1050 = vpop.permute.xlu0 %1049
    %1051 = vrot.lane.b32.xlu0 %v153, 80
    %v1052 = vpop.permute.xlu0 %1051
    %v1053 = vsel %vm162, %v1046, 0
    %v1055 = vsel %vm162, %v1048, 0
    %v1057 = vsel %vm162, %v1050, 0
    %v1059 = vsel %vm162, %v1052, 0
    %1061 = vmatprep.subr.mxu0 0.0
    %1062 = vmatpush1.xpose.msra.mxu0 0.0
    %1063 = vmatprep.subr.mxu0 0.0
    %1064 = vmatpush1.xpose.msra.mxu0 0.0
    %1065 = vmatprep.subr.mxu0 0.0
    %1066 = vmatpush1.xpose.msra.mxu0 0.0
    %1067 = vmatprep.subr.mxu0 0.0
    %1068 = vmatpush1.xpose.msra.mxu0 0.0
    %1069 = vmatprep.subr.mxu0 0.0
    %1070 = vmatpush1.xpose.msra.mxu0 0.0
    %1071 = vmatprep.subr.mxu0 0.0
    %1072 = vmatpush1.xpose.msra.mxu0 0.0
    %1073 = vmatprep.subr.mxu0 0.0
    %1074 = vmatpush1.xpose.msra.mxu0 0.0
    %1075 = vmatprep.subr.mxu0 0.0
    %1076 = vmatpush1.xpose.msra.mxu0 0.0
    %1077 = vmatprep.subr.mxu0 0.0
    %1078 = vmatpush1.xpose.msra.mxu0 0.0
    %1079 = vmatprep.subr.mxu0 0.0
    %1080 = vmatpush1.xpose.msra.mxu0 0.0
    %1081 = vmatprep.subr.mxu0 0.0
    %1082 = vmatpush1.xpose.msra.mxu0 0.0
    %1083 = vmatprep.subr.mxu0 0.0
    %1084 = vmatpush1.xpose.msra.mxu0 0.0
    %1085 = vmatprep.subr.mxu0 0.0
    %1086 = vmatpush1.xpose.msra.mxu0 0.0
    %1087 = vmatprep.subr.mxu0 0.0
    %1088 = vmatpush1.xpose.msra.mxu0 0.0
    %1089 = vmatprep.subr.mxu0 0.0
    %1090 = vmatpush1.xpose.msra.mxu0 %v1059
    %1091 = vmatprep.subr.mxu0 0.0
    %1092 = vmatpush1.xpose.msra.mxu0 %v1057
    %1093 = vmatprep.subr.mxu0 0.0
    %1094 = vmatpush2.xpose.msra.mxu0 0.0
    %1095 = vmatprep.subr.mxu0 0.0
    %1096 = vmatpush2.xpose.msra.mxu0 0.0
    %1097 = vmatprep.subr.mxu0 0.0
    %1098 = vmatpush2.xpose.msra.mxu0 0.0
    %1099 = vmatprep.subr.mxu0 0.0
    %1100 = vmatpush2.xpose.msra.mxu0 0.0
    %1101 = vmatprep.subr.mxu0 0.0
    %1102 = vmatpush2.xpose.msra.mxu0 0.0
    %1103 = vmatprep.subr.mxu0 0.0
    %1104 = vmatpush2.xpose.msra.mxu0 0.0
    %1105 = vmatprep.subr.mxu0 0.0
    %1106 = vmatpush2.xpose.msra.mxu0 0.0
    %1107 = vmatprep.subr.mxu0 0.0
    %1108 = vmatpush2.xpose.msra.mxu0 0.0
    %1109 = vmatprep.subr.mxu0 0.0
    %1110 = vmatpush2.xpose.msra.mxu0 0.0
    %1111 = vmatprep.subr.mxu0 0.0
    %1112 = vmatpush2.xpose.msra.mxu0 0.0
    %1113 = vmatprep.subr.mxu0 0.0
    %1114 = vmatpush2.xpose.msra.mxu0 0.0
    %1115 = vmatprep.subr.mxu0 0.0
    %1116 = vmatpush2.xpose.msra.mxu0 0.0
    %1117 = vmatprep.subr.mxu0 0.0
    %1118 = vmatpush2.xpose.msra.mxu0 0.0
    %1119 = vmatprep.subr.mxu0 0.0
    %1120 = vmatpush2.xpose.msra.mxu0 0.0
    %1121 = vmatprep.subr.mxu0 0.0
    %1122 = vmatpush2.xpose.msra.mxu0 0.0
    %1123 = vmatprep.subr.mxu0 0.0
    %1124 = vmatpush2.xpose.msra.mxu0 0.0
    %1125 = vmatprep.mubr.f32.mxu0 0.0
    %1126 = vmatmul.mubr.f32.gmra.mxu0 %v1053
    %v1127 = vpop.f32.mrf.mxu0
    %v1128 = vadd.f32 0.0, %v1127
    %v1129 = vpop.f32.mrf.mxu0
    %1130 = vmatprep.mubr.f32.mxu0 0.0
    %1131 = vmatmul.mubr.f32.gmra.mxu0 %v1055
    %v1132 = vpop.f32.mrf.mxu0
    %v1133 = vadd.f32 0.0, %v1132
    %v1134 = vpop.f32.mrf.mxu0
    %1135 = vdwg.mxu0
    %v1136 = vsel %vm335, %v1037, -inf
    %1137 = vmax.xlane.f32.xlu0 %v1136
    %v1138 = vpop.xlane.xlu0 %1137
    %v1139 = vsel %vm335, %v1042, -inf
    %1140 = vmax.xlane.f32.xlu0 %v1139
    %v1141 = vpop.xlane.xlu0 %1140
    %v1142 = vsel %vm335, %v1128, -inf
    %1143 = vmax.xlane.f32.xlu0 %v1142
    %v1144 = vpop.xlane.xlu0 %1143
    %v1145 = vsel %vm335, %v1133, -inf
    %1146 = vmax.xlane.f32.xlu0 %v1145
    %v1147 = vpop.xlane.xlu0 %1146
    %v1148 = vsub.f32 %v1037, %v1138
    %v1149 = vsub.f32 %v1042, %v1141
    %v1150 = vsub.f32 %v1128, %v1144
    %v1151 = vsub.f32 %v1133, %v1147
    %v1152 = vmul.f32 %v1148, 1.442695
    %v1153 = vpow.pop %v1152
    %v1154 = vmul.f32 %v1149, 1.442695
    %v1155 = vpow.pop %v1154
    %v1156 = vmul.f32 %v1150, 1.442695
    %v1157 = vpow.pop %v1156
    %v1158 = vmul.f32 %v1151, 1.442695
    %v1159 = vpow.pop %v1158
    %v1160 = vsel %vm335, %v1153, 0.0
    %1161 = vadd.xlane.f32.xlu0 %v1160
    %v1162 = vpop.xlane.xlu0 %1161
    %v1163 = vsel %vm335, %v1155, 0.0
    %1164 = vadd.xlane.f32.xlu0 %v1163
    %v1165 = vpop.xlane.xlu0 %1164
    %v1166 = vsel %vm335, %v1157, 0.0
    %1167 = vadd.xlane.f32.xlu0 %v1166
    %v1168 = vpop.xlane.xlu0 %1167
    %v1169 = vsel %vm335, %v1159, 0.0
    %1170 = vadd.xlane.f32.xlu0 %v1169
    %v1171 = vpop.xlane.xlu0 %1170
    %v1172 = vrcp.pop %v1162
    %v1173 = vrcp.pop %v1165
    %v1174 = vrcp.pop %v1168
    %v1175 = vrcp.pop %v1171
    %v1176 = vmul.f32 %v1153, %v1172
    %v1177 = vmul.f32 %v1155, %v1173
    %v1178 = vmul.f32 %v1157, %v1174
    %v1179 = vmul.f32 %v1159, %v1175
    %1180 = vrot.lane.b32.xlu0 %v138, 48
    %v1181 = vpop.permute.xlu0 %1180
    %1182 = vrot.lane.b32.xlu0 %v143, 48
    %v1183 = vpop.permute.xlu0 %1182
    %v1187 = vsel %vm335, %v1176, 0
    %v1190 = vsel %vm335, %v1177, 0
    %1192 = vmatprep.subr.mxu0 0.0
    %1193 = vmatpush1.msra.mxu0 0.0
    %1194 = vmatprep.subr.mxu0 0.0
    %1195 = vmatpush1.msra.mxu0 0.0
    %1196 = vmatprep.subr.mxu0 0.0
    %1197 = vmatpush1.msra.mxu0 0.0
    %1198 = vmatprep.subr.mxu0 0.0
    %1199 = vmatpush1.msra.mxu0 0.0
    %1200 = vmatprep.subr.mxu0 0.0
    %1201 = vmatpush1.msra.mxu0 0.0
    %1202 = vmatprep.subr.mxu0 0.0
    %1203 = vmatpush1.msra.mxu0 0.0
    %1204 = vmatprep.subr.mxu0 0.0
    %1205 = vmatpush1.msra.mxu0 0.0
    %1206 = vmatprep.subr.mxu0 0.0
    %1207 = vmatpush1.msra.mxu0 0.0
    %1208 = vmatprep.subr.mxu0 0.0
    %1209 = vmatpush1.msra.mxu0 0.0
    %1210 = vmatprep.subr.mxu0 0.0
    %1211 = vmatpush1.msra.mxu0 0.0
    %1212 = vmatprep.subr.mxu0 0.0
    %1213 = vmatpush1.msra.mxu0 0.0
    %1214 = vmatprep.subr.mxu0 0.0
    %1215 = vmatpush1.msra.mxu0 0.0
    %1216 = vmatprep.subr.mxu0 0.0
    %1217 = vmatpush1.msra.mxu0 0.0
    %1218 = vmatprep.subr.mxu0 0.0
    %1219 = vmatpush1.msra.mxu0 0.0
    %1220 = vmatprep.subr.mxu0 0.0
    %1221 = vmatpush1.msra.mxu0 %v1183
    %1222 = vmatprep.subr.mxu0 0.0
    %1223 = vmatpush1.msra.mxu0 %v1181
    %1224 = vmatprep.subr.mxu0 0.0
    %1225 = vmatpush2.msra.mxu0 0.0
    %1226 = vmatprep.subr.mxu0 0.0
    %1227 = vmatpush2.msra.mxu0 0.0
    %1228 = vmatprep.subr.mxu0 0.0
    %1229 = vmatpush2.msra.mxu0 0.0
    %1230 = vmatprep.subr.mxu0 0.0
    %1231 = vmatpush2.msra.mxu0 0.0
    %1232 = vmatprep.subr.mxu0 0.0
    %1233 = vmatpush2.msra.mxu0 0.0
    %1234 = vmatprep.subr.mxu0 0.0
    %1235 = vmatpush2.msra.mxu0 0.0
    %1236 = vmatprep.subr.mxu0 0.0
    %1237 = vmatpush2.msra.mxu0 0.0
    %1238 = vmatprep.subr.mxu0 0.0
    %1239 = vmatpush2.msra.mxu0 0.0
    %1240 = vmatprep.subr.mxu0 0.0
    %1241 = vmatpush2.msra.mxu0 0.0
    %1242 = vmatprep.subr.mxu0 0.0
    %1243 = vmatpush2.msra.mxu0 0.0
    %1244 = vmatprep.subr.mxu0 0.0
    %1245 = vmatpush2.msra.mxu0 0.0
    %1246 = vmatprep.subr.mxu0 0.0
    %1247 = vmatpush2.msra.mxu0 0.0
    %1248 = vmatprep.subr.mxu0 0.0
    %1249 = vmatpush2.msra.mxu0 0.0
    %1250 = vmatprep.subr.mxu0 0.0
    %1251 = vmatpush2.msra.mxu0 0.0
    %1252 = vmatprep.subr.mxu0 0.0
    %1253 = vmatpush2.msra.mxu0 0.0
    %1254 = vmatprep.subr.mxu0 0.0
    %1255 = vmatpush2.msra.mxu0 0.0
    %1256 = vmatprep.mubr.f32.mxu0 0.0
    %1257 = vmatmul.mubr.f32.gmra.mxu0 %v1187
    %v1258 = vpop.f32.mrf.mxu0
    %v1259 = vadd.f32 0.0, %v1258
    %v1260 = vpop.f32.mrf.mxu0
    %1261 = vmatprep.mubr.f32.mxu0 0.0
    %1262 = vmatmul.mubr.f32.gmra.mxu0 %v1190
    %v1263 = vpop.f32.mrf.mxu0
    %v1264 = vadd.f32 0.0, %v1263
    %v1265 = vpop.f32.mrf.mxu0
    %1266 = vdwg.mxu0
    %1267 = vrot.lane.b32.xlu0 %v148, 48
    %v1268 = vpop.permute.xlu0 %1267
    %1269 = vrot.lane.b32.xlu0 %v153, 48
    %v1270 = vpop.permute.xlu0 %1269
    %v1274 = vsel %vm335, %v1178, 0
    %v1277 = vsel %vm335, %v1179, 0
    %1279 = vmatprep.subr.mxu0 0.0
    %1280 = vmatpush1.msra.mxu0 0.0
    %1281 = vmatprep.subr.mxu0 0.0
    %1282 = vmatpush1.msra.mxu0 0.0
    %1283 = vmatprep.subr.mxu0 0.0
    %1284 = vmatpush1.msra.mxu0 0.0
    %1285 = vmatprep.subr.mxu0 0.0
    %1286 = vmatpush1.msra.mxu0 0.0
    %1287 = vmatprep.subr.mxu0 0.0
    %1288 = vmatpush1.msra.mxu0 0.0
    %1289 = vmatprep.subr.mxu0 0.0
    %1290 = vmatpush1.msra.mxu0 0.0
    %1291 = vmatprep.subr.mxu0 0.0
    %1292 = vmatpush1.msra.mxu0 0.0
    %1293 = vmatprep.subr.mxu0 0.0
    %1294 = vmatpush1.msra.mxu0 0.0
    %1295 = vmatprep.subr.mxu0 0.0
    %1296 = vmatpush1.msra.mxu0 0.0
    %1297 = vmatprep.subr.mxu0 0.0
    %1298 = vmatpush1.msra.mxu0 0.0
    %1299 = vmatprep.subr.mxu0 0.0
    %1300 = vmatpush1.msra.mxu0 0.0
    %1301 = vmatprep.subr.mxu0 0.0
    %1302 = vmatpush1.msra.mxu0 0.0
    %1303 = vmatprep.subr.mxu0 0.0
    %1304 = vmatpush1.msra.mxu0 0.0
    %1305 = vmatprep.subr.mxu0 0.0
    %1306 = vmatpush1.msra.mxu0 0.0
    %1307 = vmatprep.subr.mxu0 0.0
    %1308 = vmatpush1.msra.mxu0 %v1270
    %1309 = vmatprep.subr.mxu0 0.0
    %1310 = vmatpush1.msra.mxu0 %v1268
    %1311 = vmatprep.subr.mxu0 0.0
    %1312 = vmatpush2.msra.mxu0 0.0
    %1313 = vmatprep.subr.mxu0 0.0
    %1314 = vmatpush2.msra.mxu0 0.0
    %1315 = vmatprep.subr.mxu0 0.0
    %1316 = vmatpush2.msra.mxu0 0.0
    %1317 = vmatprep.subr.mxu0 0.0
    %1318 = vmatpush2.msra.mxu0 0.0
    %1319 = vmatprep.subr.mxu0 0.0
    %1320 = vmatpush2.msra.mxu0 0.0
    %1321 = vmatprep.subr.mxu0 0.0
    %1322 = vmatpush2.msra.mxu0 0.0
    %1323 = vmatprep.subr.mxu0 0.0
    %1324 = vmatpush2.msra.mxu0 0.0
    %1325 = vmatprep.subr.mxu0 0.0
    %1326 = vmatpush2.msra.mxu0 0.0
    %1327 = vmatprep.subr.mxu0 0.0
    %1328 = vmatpush2.msra.mxu0 0.0
    %1329 = vmatprep.subr.mxu0 0.0
    %1330 = vmatpush2.msra.mxu0 0.0
    %1331 = vmatprep.subr.mxu0 0.0
    %1332 = vmatpush2.msra.mxu0 0.0
    %1333 = vmatprep.subr.mxu0 0.0
    %1334 = vmatpush2.msra.mxu0 0.0
    %1335 = vmatprep.subr.mxu0 0.0
    %1336 = vmatpush2.msra.mxu0 0.0
    %1337 = vmatprep.subr.mxu0 0.0
    %1338 = vmatpush2.msra.mxu0 0.0
    %1339 = vmatprep.subr.mxu0 0.0
    %1340 = vmatpush2.msra.mxu0 0.0
    %1341 = vmatprep.subr.mxu0 0.0
    %1342 = vmatpush2.msra.mxu0 0.0
    %1343 = vmatprep.mubr.f32.mxu0 0.0
    %1344 = vmatmul.mubr.f32.gmra.mxu0 %v1274
    %v1345 = vpop.f32.mrf.mxu0
    %v1346 = vadd.f32 0.0, %v1345
    %v1347 = vpop.f32.mrf.mxu0
    %1348 = vmatprep.mubr.f32.mxu0 0.0
    %1349 = vmatmul.mubr.f32.gmra.mxu0 %v1277
    %v1350 = vpop.f32.mrf.mxu0
    %v1351 = vadd.f32 0.0, %v1350
    %v1352 = vpop.f32.mrf.mxu0
    %1353 = vdwg.mxu0
    %1354 = vrot.lane.b32.xlu0 %v138, 104
    %v1355 = vpop.permute.xlu0 %1354
    %1356 = vrot.lane.b32.xlu0 %v143, 104
    %v1357 = vpop.permute.xlu0 %1356
    %1358 = vrot.lane.b32.xlu0 %v138, 72
    %v1359 = vpop.permute.xlu0 %1358
    %1360 = vrot.lane.b32.xlu0 %v143, 72
    %v1361 = vpop.permute.xlu0 %1360
    %v1362 = vsel %vm162, %v1355, 0
    %v1364 = vsel %vm162, %v1357, 0
    %v1366 = vsel %vm162, %v1359, 0
    %v1368 = vsel %vm162, %v1361, 0
    %1370 = vmatprep.subr.mxu0 0.0
    %1371 = vmatpush1.xpose.msra.mxu0 0.0
    %1372 = vmatprep.subr.mxu0 0.0
    %1373 = vmatpush1.xpose.msra.mxu0 0.0
    %1374 = vmatprep.subr.mxu0 0.0
    %1375 = vmatpush1.xpose.msra.mxu0 0.0
    %1376 = vmatprep.subr.mxu0 0.0
    %1377 = vmatpush1.xpose.msra.mxu0 0.0
    %1378 = vmatprep.subr.mxu0 0.0
    %1379 = vmatpush1.xpose.msra.mxu0 0.0
    %1380 = vmatprep.subr.mxu0 0.0
    %1381 = vmatpush1.xpose.msra.mxu0 0.0
    %1382 = vmatprep.subr.mxu0 0.0
    %1383 = vmatpush1.xpose.msra.mxu0 0.0
    %1384 = vmatprep.subr.mxu0 0.0
    %1385 = vmatpush1.xpose.msra.mxu0 0.0
    %1386 = vmatprep.subr.mxu0 0.0
    %1387 = vmatpush1.xpose.msra.mxu0 0.0
    %1388 = vmatprep.subr.mxu0 0.0
    %1389 = vmatpush1.xpose.msra.mxu0 0.0
    %1390 = vmatprep.subr.mxu0 0.0
    %1391 = vmatpush1.xpose.msra.mxu0 0.0
    %1392 = vmatprep.subr.mxu0 0.0
    %1393 = vmatpush1.xpose.msra.mxu0 0.0
    %1394 = vmatprep.subr.mxu0 0.0
    %1395 = vmatpush1.xpose.msra.mxu0 0.0
    %1396 = vmatprep.subr.mxu0 0.0
    %1397 = vmatpush1.xpose.msra.mxu0 0.0
    %1398 = vmatprep.subr.mxu0 0.0
    %1399 = vmatpush1.xpose.msra.mxu0 %v1368
    %1400 = vmatprep.subr.mxu0 0.0
    %1401 = vmatpush1.xpose.msra.mxu0 %v1366
    %1402 = vmatprep.subr.mxu0 0.0
    %1403 = vmatpush2.xpose.msra.mxu0 0.0
    %1404 = vmatprep.subr.mxu0 0.0
    %1405 = vmatpush2.xpose.msra.mxu0 0.0
    %1406 = vmatprep.subr.mxu0 0.0
    %1407 = vmatpush2.xpose.msra.mxu0 0.0
    %1408 = vmatprep.subr.mxu0 0.0
    %1409 = vmatpush2.xpose.msra.mxu0 0.0
    %1410 = vmatprep.subr.mxu0 0.0
    %1411 = vmatpush2.xpose.msra.mxu0 0.0
    %1412 = vmatprep.subr.mxu0 0.0
    %1413 = vmatpush2.xpose.msra.mxu0 0.0
    %1414 = vmatprep.subr.mxu0 0.0
    %1415 = vmatpush2.xpose.msra.mxu0 0.0
    %1416 = vmatprep.subr.mxu0 0.0
    %1417 = vmatpush2.xpose.msra.mxu0 0.0
    %1418 = vmatprep.subr.mxu0 0.0
    %1419 = vmatpush2.xpose.msra.mxu0 0.0
    %1420 = vmatprep.subr.mxu0 0.0
    %1421 = vmatpush2.xpose.msra.mxu0 0.0
    %1422 = vmatprep.subr.mxu0 0.0
    %1423 = vmatpush2.xpose.msra.mxu0 0.0
    %1424 = vmatprep.subr.mxu0 0.0
    %1425 = vmatpush2.xpose.msra.mxu0 0.0
    %1426 = vmatprep.subr.mxu0 0.0
    %1427 = vmatpush2.xpose.msra.mxu0 0.0
    %1428 = vmatprep.subr.mxu0 0.0
    %1429 = vmatpush2.xpose.msra.mxu0 0.0
    %1430 = vmatprep.subr.mxu0 0.0
    %1431 = vmatpush2.xpose.msra.mxu0 0.0
    %1432 = vmatprep.subr.mxu0 0.0
    %1433 = vmatpush2.xpose.msra.mxu0 0.0
    %1434 = vmatprep.mubr.f32.mxu0 0.0
    %1435 = vmatmul.mubr.f32.gmra.mxu0 %v1362
    %v1436 = vpop.f32.mrf.mxu0
    %v1437 = vadd.f32 0.0, %v1436
    %v1438 = vpop.f32.mrf.mxu0
    %1439 = vmatprep.mubr.f32.mxu0 0.0
    %1440 = vmatmul.mubr.f32.gmra.mxu0 %v1364
    %v1441 = vpop.f32.mrf.mxu0
    %v1442 = vadd.f32 0.0, %v1441
    %v1443 = vpop.f32.mrf.mxu0
    %1444 = vdwg.mxu0
    %1445 = vrot.lane.b32.xlu0 %v148, 104
    %v1446 = vpop.permute.xlu0 %1445
    %1447 = vrot.lane.b32.xlu0 %v153, 104
    %v1448 = vpop.permute.xlu0 %1447
    %1449 = vrot.lane.b32.xlu0 %v148, 72
    %v1450 = vpop.permute.xlu0 %1449
    %1451 = vrot.lane.b32.xlu0 %v153, 72
    %v1452 = vpop.permute.xlu0 %1451
    %v1453 = vsel %vm162, %v1446, 0
    %v1455 = vsel %vm162, %v1448, 0
    %v1457 = vsel %vm162, %v1450, 0
    %v1459 = vsel %vm162, %v1452, 0
    %1461 = vmatprep.subr.mxu0 0.0
    %1462 = vmatpush1.xpose.msra.mxu0 0.0
    %1463 = vmatprep.subr.mxu0 0.0
    %1464 = vmatpush1.xpose.msra.mxu0 0.0
    %1465 = vmatprep.subr.mxu0 0.0
    %1466 = vmatpush1.xpose.msra.mxu0 0.0
    %1467 = vmatprep.subr.mxu0 0.0
    %1468 = vmatpush1.xpose.msra.mxu0 0.0
    %1469 = vmatprep.subr.mxu0 0.0
    %1470 = vmatpush1.xpose.msra.mxu0 0.0
    %1471 = vmatprep.subr.mxu0 0.0
    %1472 = vmatpush1.xpose.msra.mxu0 0.0
    %1473 = vmatprep.subr.mxu0 0.0
    %1474 = vmatpush1.xpose.msra.mxu0 0.0
    %1475 = vmatprep.subr.mxu0 0.0
    %1476 = vmatpush1.xpose.msra.mxu0 0.0
    %1477 = vmatprep.subr.mxu0 0.0
    %1478 = vmatpush1.xpose.msra.mxu0 0.0
    %1479 = vmatprep.subr.mxu0 0.0
    %1480 = vmatpush1.xpose.msra.mxu0 0.0
    %1481 = vmatprep.subr.mxu0 0.0
    %1482 = vmatpush1.xpose.msra.mxu0 0.0
    %1483 = vmatprep.subr.mxu0 0.0
    %1484 = vmatpush1.xpose.msra.mxu0 0.0
    %1485 = vmatprep.subr.mxu0 0.0
    %1486 = vmatpush1.xpose.msra.mxu0 0.0
    %1487 = vmatprep.subr.mxu0 0.0
    %1488 = vmatpush1.xpose.msra.mxu0 0.0
    %1489 = vmatprep.subr.mxu0 0.0
    %1490 = vmatpush1.xpose.msra.mxu0 %v1459
    %1491 = vmatprep.subr.mxu0 0.0
    %1492 = vmatpush1.xpose.msra.mxu0 %v1457
    %1493 = vmatprep.subr.mxu0 0.0
    %1494 = vmatpush2.xpose.msra.mxu0 0.0
    %1495 = vmatprep.subr.mxu0 0.0
    %1496 = vmatpush2.xpose.msra.mxu0 0.0
    %1497 = vmatprep.subr.mxu0 0.0
    %1498 = vmatpush2.xpose.msra.mxu0 0.0
    %1499 = vmatprep.subr.mxu0 0.0
    %1500 = vmatpush2.xpose.msra.mxu0 0.0
    %1501 = vmatprep.subr.mxu0 0.0
    %1502 = vmatpush2.xpose.msra.mxu0 0.0
    %1503 = vmatprep.subr.mxu0 0.0
    %1504 = vmatpush2.xpose.msra.mxu0 0.0
    %1505 = vmatprep.subr.mxu0 0.0
    %1506 = vmatpush2.xpose.msra.mxu0 0.0
    %1507 = vmatprep.subr.mxu0 0.0
    %1508 = vmatpush2.xpose.msra.mxu0 0.0
    %1509 = vmatprep.subr.mxu0 0.0
    %1510 = vmatpush2.xpose.msra.mxu0 0.0
    %1511 = vmatprep.subr.mxu0 0.0
    %1512 = vmatpush2.xpose.msra.mxu0 0.0
    %1513 = vmatprep.subr.mxu0 0.0
    %1514 = vmatpush2.xpose.msra.mxu0 0.0
    %1515 = vmatprep.subr.mxu0 0.0
    %1516 = vmatpush2.xpose.msra.mxu0 0.0
    %1517 = vmatprep.subr.mxu0 0.0
    %1518 = vmatpush2.xpose.msra.mxu0 0.0
    %1519 = vmatprep.subr.mxu0 0.0
    %1520 = vmatpush2.xpose.msra.mxu0 0.0
    %1521 = vmatprep.subr.mxu0 0.0
    %1522 = vmatpush2.xpose.msra.mxu0 0.0
    %1523 = vmatprep.subr.mxu0 0.0
    %1524 = vmatpush2.xpose.msra.mxu0 0.0
    %1525 = vmatprep.mubr.f32.mxu0 0.0
    %1526 = vmatmul.mubr.f32.gmra.mxu0 %v1453
    %v1527 = vpop.f32.mrf.mxu0
    %v1528 = vadd.f32 0.0, %v1527
    %v1529 = vpop.f32.mrf.mxu0
    %1530 = vmatprep.mubr.f32.mxu0 0.0
    %1531 = vmatmul.mubr.f32.gmra.mxu0 %v1455
    %v1532 = vpop.f32.mrf.mxu0
    %v1533 = vadd.f32 0.0, %v1532
    %v1534 = vpop.f32.mrf.mxu0
    %1535 = vdwg.mxu0
    %v1536 = vsel %vm335, %v1437, -inf
    %1537 = vmax.xlane.f32.xlu0 %v1536
    %v1538 = vpop.xlane.xlu0 %1537
    %v1539 = vsel %vm335, %v1442, -inf
    %1540 = vmax.xlane.f32.xlu0 %v1539
    %v1541 = vpop.xlane.xlu0 %1540
    %v1542 = vsel %vm335, %v1528, -inf
    %1543 = vmax.xlane.f32.xlu0 %v1542
    %v1544 = vpop.xlane.xlu0 %1543
    %v1545 = vsel %vm335, %v1533, -inf
    %1546 = vmax.xlane.f32.xlu0 %v1545
    %v1547 = vpop.xlane.xlu0 %1546
    %v1548 = vsub.f32 %v1437, %v1538
    %v1549 = vsub.f32 %v1442, %v1541
    %v1550 = vsub.f32 %v1528, %v1544
    %v1551 = vsub.f32 %v1533, %v1547
    %v1552 = vmul.f32 %v1548, 1.442695
    %v1553 = vpow.pop %v1552
    %v1554 = vmul.f32 %v1549, 1.442695
    %v1555 = vpow.pop %v1554
    %v1556 = vmul.f32 %v1550, 1.442695
    %v1557 = vpow.pop %v1556
    %v1558 = vmul.f32 %v1551, 1.442695
    %v1559 = vpow.pop %v1558
    %v1560 = vsel %vm335, %v1553, 0.0
    %1561 = vadd.xlane.f32.xlu0 %v1560
    %v1562 = vpop.xlane.xlu0 %1561
    %v1563 = vsel %vm335, %v1555, 0.0
    %1564 = vadd.xlane.f32.xlu0 %v1563
    %v1565 = vpop.xlane.xlu0 %1564
    %v1566 = vsel %vm335, %v1557, 0.0
    %1567 = vadd.xlane.f32.xlu0 %v1566
    %v1568 = vpop.xlane.xlu0 %1567
    %v1569 = vsel %vm335, %v1559, 0.0
    %1570 = vadd.xlane.f32.xlu0 %v1569
    %v1571 = vpop.xlane.xlu0 %1570
    %v1572 = vrcp.pop %v1562
    %v1573 = vrcp.pop %v1565
    %v1574 = vrcp.pop %v1568
    %v1575 = vrcp.pop %v1571
    %v1576 = vmul.f32 %v1553, %v1572
    %v1577 = vmul.f32 %v1555, %v1573
    %v1578 = vmul.f32 %v1557, %v1574
    %v1579 = vmul.f32 %v1559, %v1575
    %1580 = vrot.lane.b32.xlu0 %v138, 40
    %v1581 = vpop.permute.xlu0 %1580
    %1582 = vrot.lane.b32.xlu0 %v143, 40
    %v1583 = vpop.permute.xlu0 %1582
    %v1587 = vsel %vm335, %v1576, 0
    %v1590 = vsel %vm335, %v1577, 0
    %1592 = vmatprep.subr.mxu0 0.0
    %1593 = vmatpush1.msra.mxu0 0.0
    %1594 = vmatprep.subr.mxu0 0.0
    %1595 = vmatpush1.msra.mxu0 0.0
    %1596 = vmatprep.subr.mxu0 0.0
    %1597 = vmatpush1.msra.mxu0 0.0
    %1598 = vmatprep.subr.mxu0 0.0
    %1599 = vmatpush1.msra.mxu0 0.0
    %1600 = vmatprep.subr.mxu0 0.0
    %1601 = vmatpush1.msra.mxu0 0.0
    %1602 = vmatprep.subr.mxu0 0.0
    %1603 = vmatpush1.msra.mxu0 0.0
    %1604 = vmatprep.subr.mxu0 0.0
    %1605 = vmatpush1.msra.mxu0 0.0
    %1606 = vmatprep.subr.mxu0 0.0
    %1607 = vmatpush1.msra.mxu0 0.0
    %1608 = vmatprep.subr.mxu0 0.0
    %1609 = vmatpush1.msra.mxu0 0.0
    %1610 = vmatprep.subr.mxu0 0.0
    %1611 = vmatpush1.msra.mxu0 0.0
    %1612 = vmatprep.subr.mxu0 0.0
    %1613 = vmatpush1.msra.mxu0 0.0
    %1614 = vmatprep.subr.mxu0 0.0
    %1615 = vmatpush1.msra.mxu0 0.0
    %1616 = vmatprep.subr.mxu0 0.0
    %1617 = vmatpush1.msra.mxu0 0.0
    %1618 = vmatprep.subr.mxu0 0.0
    %1619 = vmatpush1.msra.mxu0 0.0
    %1620 = vmatprep.subr.mxu0 0.0
    %1621 = vmatpush1.msra.mxu0 %v1583
    %1622 = vmatprep.subr.mxu0 0.0
    %1623 = vmatpush1.msra.mxu0 %v1581
    %1624 = vmatprep.subr.mxu0 0.0
    %1625 = vmatpush2.msra.mxu0 0.0
    %1626 = vmatprep.subr.mxu0 0.0
    %1627 = vmatpush2.msra.mxu0 0.0
    %1628 = vmatprep.subr.mxu0 0.0
    %1629 = vmatpush2.msra.mxu0 0.0
    %1630 = vmatprep.subr.mxu0 0.0
    %1631 = vmatpush2.msra.mxu0 0.0
    %1632 = vmatprep.subr.mxu0 0.0
    %1633 = vmatpush2.msra.mxu0 0.0
    %1634 = vmatprep.subr.mxu0 0.0
    %1635 = vmatpush2.msra.mxu0 0.0
    %1636 = vmatprep.subr.mxu0 0.0
    %1637 = vmatpush2.msra.mxu0 0.0
    %1638 = vmatprep.subr.mxu0 0.0
    %1639 = vmatpush2.msra.mxu0 0.0
    %1640 = vmatprep.subr.mxu0 0.0
    %1641 = vmatpush2.msra.mxu0 0.0
    %1642 = vmatprep.subr.mxu0 0.0
    %1643 = vmatpush2.msra.mxu0 0.0
    %1644 = vmatprep.subr.mxu0 0.0
    %1645 = vmatpush2.msra.mxu0 0.0
    %1646 = vmatprep.subr.mxu0 0.0
    %1647 = vmatpush2.msra.mxu0 0.0
    %1648 = vmatprep.subr.mxu0 0.0
    %1649 = vmatpush2.msra.mxu0 0.0
    %1650 = vmatprep.subr.mxu0 0.0
    %1651 = vmatpush2.msra.mxu0 0.0
    %1652 = vmatprep.subr.mxu0 0.0
    %1653 = vmatpush2.msra.mxu0 0.0
    %1654 = vmatprep.subr.mxu0 0.0
    %1655 = vmatpush2.msra.mxu0 0.0
    %1656 = vmatprep.mubr.f32.mxu0 0.0
    %1657 = vmatmul.mubr.f32.gmra.mxu0 %v1587
    %v1658 = vpop.f32.mrf.mxu0
    %v1659 = vadd.f32 0.0, %v1658
    %v1660 = vpop.f32.mrf.mxu0
    %1661 = vmatprep.mubr.f32.mxu0 0.0
    %1662 = vmatmul.mubr.f32.gmra.mxu0 %v1590
    %v1663 = vpop.f32.mrf.mxu0
    %v1664 = vadd.f32 0.0, %v1663
    %v1665 = vpop.f32.mrf.mxu0
    %1666 = vdwg.mxu0
    %1667 = vrot.lane.b32.xlu0 %v148, 40
    %v1668 = vpop.permute.xlu0 %1667
    %1669 = vrot.lane.b32.xlu0 %v153, 40
    %v1670 = vpop.permute.xlu0 %1669
    %v1674 = vsel %vm335, %v1578, 0
    %v1677 = vsel %vm335, %v1579, 0
    %1679 = vmatprep.subr.mxu0 0.0
    %1680 = vmatpush1.msra.mxu0 0.0
    %1681 = vmatprep.subr.mxu0 0.0
    %1682 = vmatpush1.msra.mxu0 0.0
    %1683 = vmatprep.subr.mxu0 0.0
    %1684 = vmatpush1.msra.mxu0 0.0
    %1685 = vmatprep.subr.mxu0 0.0
    %1686 = vmatpush1.msra.mxu0 0.0
    %1687 = vmatprep.subr.mxu0 0.0
    %1688 = vmatpush1.msra.mxu0 0.0
    %1689 = vmatprep.subr.mxu0 0.0
    %1690 = vmatpush1.msra.mxu0 0.0
    %1691 = vmatprep.subr.mxu0 0.0
    %1692 = vmatpush1.msra.mxu0 0.0
    %1693 = vmatprep.subr.mxu0 0.0
    %1694 = vmatpush1.msra.mxu0 0.0
    %1695 = vmatprep.subr.mxu0 0.0
    %1696 = vmatpush1.msra.mxu0 0.0
    %1697 = vmatprep.subr.mxu0 0.0
    %1698 = vmatpush1.msra.mxu0 0.0
    %1699 = vmatprep.subr.mxu0 0.0
    %1700 = vmatpush1.msra.mxu0 0.0
    %1701 = vmatprep.subr.mxu0 0.0
    %1702 = vmatpush1.msra.mxu0 0.0
    %1703 = vmatprep.subr.mxu0 0.0
    %1704 = vmatpush1.msra.mxu0 0.0
    %1705 = vmatprep.subr.mxu0 0.0
    %1706 = vmatpush1.msra.mxu0 0.0
    %1707 = vmatprep.subr.mxu0 0.0
    %1708 = vmatpush1.msra.mxu0 %v1670
    %1709 = vmatprep.subr.mxu0 0.0
    %1710 = vmatpush1.msra.mxu0 %v1668
    %1711 = vmatprep.subr.mxu0 0.0
    %1712 = vmatpush2.msra.mxu0 0.0
    %1713 = vmatprep.subr.mxu0 0.0
    %1714 = vmatpush2.msra.mxu0 0.0
    %1715 = vmatprep.subr.mxu0 0.0
    %1716 = vmatpush2.msra.mxu0 0.0
    %1717 = vmatprep.subr.mxu0 0.0
    %1718 = vmatpush2.msra.mxu0 0.0
    %1719 = vmatprep.subr.mxu0 0.0
    %1720 = vmatpush2.msra.mxu0 0.0
    %1721 = vmatprep.subr.mxu0 0.0
    %1722 = vmatpush2.msra.mxu0 0.0
    %1723 = vmatprep.subr.mxu0 0.0
    %1724 = vmatpush2.msra.mxu0 0.0
    %1725 = vmatprep.subr.mxu0 0.0
    %1726 = vmatpush2.msra.mxu0 0.0
    %1727 = vmatprep.subr.mxu0 0.0
    %1728 = vmatpush2.msra.mxu0 0.0
    %1729 = vmatprep.subr.mxu0 0.0
    %1730 = vmatpush2.msra.mxu0 0.0
    %1731 = vmatprep.subr.mxu0 0.0
    %1732 = vmatpush2.msra.mxu0 0.0
    %1733 = vmatprep.subr.mxu0 0.0
    %1734 = vmatpush2.msra.mxu0 0.0
    %1735 = vmatprep.subr.mxu0 0.0
    %1736 = vmatpush2.msra.mxu0 0.0
    %1737 = vmatprep.subr.mxu0 0.0
    %1738 = vmatpush2.msra.mxu0 0.0
    %1739 = vmatprep.subr.mxu0 0.0
    %1740 = vmatpush2.msra.mxu0 0.0
    %1741 = vmatprep.subr.mxu0 0.0
    %1742 = vmatpush2.msra.mxu0 0.0
    %1743 = vmatprep.mubr.f32.mxu0 0.0
    %1744 = vmatmul.mubr.f32.gmra.mxu0 %v1674
    %v1745 = vpop.f32.mrf.mxu0
    %v1746 = vadd.f32 0.0, %v1745
    %v1747 = vpop.f32.mrf.mxu0
    %1748 = vmatprep.mubr.f32.mxu0 0.0
    %1749 = vmatmul.mubr.f32.gmra.mxu0 %v1677
    %v1750 = vpop.f32.mrf.mxu0
    %v1751 = vadd.f32 0.0, %v1750
    %v1752 = vpop.f32.mrf.mxu0
    %1753 = vdwg.mxu0
    %1758 = vrot.lane.b32.xlu0 %v859, 8
    %v1759 = vpop.permute.xlu0 %1758
    %1760 = vrot.lane.b32.xlu0 %v864, 8
    %v1761 = vpop.permute.xlu0 %1760
    %1762 = vrot.lane.b32.xlu0 %v946, 8
    %v1763 = vpop.permute.xlu0 %1762
    %1764 = vrot.lane.b32.xlu0 %v951, 8
    %v1765 = vpop.permute.xlu0 %1764
    %1774 = vrot.lane.b32.xlu0 %v1259, 16
    %v1775 = vpop.permute.xlu0 %1774
    %1776 = vrot.lane.b32.xlu0 %v1264, 16
    %v1777 = vpop.permute.xlu0 %1776
    %1778 = vrot.lane.b32.xlu0 %v1346, 16
    %v1779 = vpop.permute.xlu0 %1778
    %1780 = vrot.lane.b32.xlu0 %v1351, 16
    %v1781 = vpop.permute.xlu0 %1780
    %1790 = vrot.lane.b32.xlu0 %v1659, 24
    %v1791 = vpop.permute.xlu0 %1790
    %1792 = vrot.lane.b32.xlu0 %v1664, 24
    %v1793 = vpop.permute.xlu0 %1792
    %1794 = vrot.lane.b32.xlu0 %v1746, 24
    %v1795 = vpop.permute.xlu0 %1794
    %1796 = vrot.lane.b32.xlu0 %v1751, 24
    %v1797 = vpop.permute.xlu0 %1796
    %v1802 = vsel %vm162, %v459, %v1759
    %v1803 = vsel %vm162, %v464, %v1761
    %v1804 = vsel %vm162, %v546, %v1763
    %v1805 = vsel %vm162, %v551, %v1765
    %v1806 = vsel %vm335, %v1802, %v1775
    %v1807 = vsel %vm335, %v1803, %v1777
    %v1808 = vsel %vm335, %v1804, %v1779
    %v1809 = vsel %vm335, %v1805, %v1781
    %vm1810 = vcmask 195584
    %v1811 = vsel %vm1810, %v1806, %v1791
    %v1812 = vsel %vm1810, %v1807, %v1793
    %v1813 = vsel %vm1810, %v1808, %v1795
    %v1814 = vsel %vm1810, %v1809, %v1797
    %v1815 = vlaneseq
    %v1816 = vshrl.u32 %v1815, 7
    %v1817 = vsub.s32 0, %v1816
    %v1818 = vrot.slane %v53, %v1817
    %v1820 = vsel %vm58, %v1811, 0
    %v1823 = vsel %vm58, %v1812, 0
    %v1826 = vsel %vm58, %v1813, 0
    %v1829 = vsel %vm58, %v1814, 0
    %1831 = vmatprep.subr.mxu0 0.0
    %1832 = vmatpush1.msra.mxu0 0.0
    %1833 = vmatprep.subr.mxu0 0.0
    %1834 = vmatpush1.msra.mxu0 0.0
    %1835 = vmatprep.subr.mxu0 0.0
    %1836 = vmatpush1.msra.mxu0 0.0
    %1837 = vmatprep.subr.mxu0 0.0
    %1838 = vmatpush1.msra.mxu0 0.0
    %1839 = vmatprep.subr.mxu0 0.0
    %1840 = vmatpush1.msra.mxu0 0.0
    %1841 = vmatprep.subr.mxu0 0.0
    %1842 = vmatpush1.msra.mxu0 0.0
    %1843 = vmatprep.subr.mxu0 0.0
    %1844 = vmatpush1.msra.mxu0 0.0
    %1845 = vmatprep.subr.mxu0 0.0
    %1846 = vmatpush1.msra.mxu0 0.0
    %1847 = vmatprep.subr.mxu0 0.0
    %1848 = vmatpush1.msra.mxu0 0.0
    %1849 = vmatprep.subr.mxu0 0.0
    %1850 = vmatpush1.msra.mxu0 0.0
    %1851 = vmatprep.subr.mxu0 0.0
    %1852 = vmatpush1.msra.mxu0 0.0
    %1853 = vmatprep.subr.mxu0 0.0
    %1854 = vmatpush1.msra.mxu0 0.0
    %1855 = vmatprep.subr.mxu0 0.0
    %1856 = vmatpush1.msra.mxu0 %v51
    %1857 = vmatprep.subr.mxu0 0.0
    %1858 = vmatpush1.msra.mxu0 %v50
    %1859 = vmatprep.subr.mxu0 0.0
    %1860 = vmatpush1.msra.mxu0 %v49
    %1861 = vmatprep.subr.mxu0 0.0
    %1862 = vmatpush1.msra.mxu0 %v48
    %1863 = vmatprep.subr.mxu0 0.0
    %1864 = vmatpush2.msra.mxu0 0.0
    %1865 = vmatprep.subr.mxu0 0.0
    %1866 = vmatpush2.msra.mxu0 0.0
    %1867 = vmatprep.subr.mxu0 0.0
    %1868 = vmatpush2.msra.mxu0 0.0
    %1869 = vmatprep.subr.mxu0 0.0
    %1870 = vmatpush2.msra.mxu0 0.0
    %1871 = vmatprep.subr.mxu0 0.0
    %1872 = vmatpush2.msra.mxu0 0.0
    %1873 = vmatprep.subr.mxu0 0.0
    %1874 = vmatpush2.msra.mxu0 0.0
    %1875 = vmatprep.subr.mxu0 0.0
    %1876 = vmatpush2.msra.mxu0 0.0
    %1877 = vmatprep.subr.mxu0 0.0
    %1878 = vmatpush2.msra.mxu0 0.0
    %1879 = vmatprep.subr.mxu0 0.0
    %1880 = vmatpush2.msra.mxu0 0.0
    %1881 = vmatprep.subr.mxu0 0.0
    %1882 = vmatpush2.msra.mxu0 0.0
    %1883 = vmatprep.subr.mxu0 0.0
    %1884 = vmatpush2.msra.mxu0 0.0
    %1885 = vmatprep.subr.mxu0 0.0
    %1886 = vmatpush2.msra.mxu0 0.0
    %1887 = vmatprep.subr.mxu0 0.0
    %1888 = vmatpush2.msra.mxu0 0.0
    %1889 = vmatprep.subr.mxu0 0.0
    %1890 = vmatpush2.msra.mxu0 0.0
    %1891 = vmatprep.subr.mxu0 0.0
    %1892 = vmatpush2.msra.mxu0 0.0
    %1893 = vmatprep.subr.mxu0 0.0
    %1894 = vmatpush2.msra.mxu0 0.0
    %1895 = vmatprep.mubr.f32.mxu0 0.0
    %1896 = vmatmul.mubr.f32.gmra.mxu0 %v1820
    %v1897 = vpop.f32.mrf.mxu0
    %v1898 = vadd.f32 %v1818, %v1897
    %v1899 = vpop.f32.mrf.mxu0
    %1900 = vmatprep.mubr.f32.mxu0 0.0
    %1901 = vmatmul.mubr.f32.gmra.mxu0 %v1823
    %v1902 = vpop.f32.mrf.mxu0
    %v1903 = vadd.f32 %v1818, %v1902
    %v1904 = vpop.f32.mrf.mxu0
    %1905 = vmatprep.mubr.f32.mxu0 0.0
    %1906 = vmatmul.mubr.f32.gmra.mxu0 %v1826
    %v1907 = vpop.f32.mrf.mxu0
    %v1908 = vadd.f32 %v1818, %v1907
    %v1909 = vpop.f32.mrf.mxu0
    %1910 = vmatprep.mubr.f32.mxu0 0.0
    %1911 = vmatmul.mubr.f32.gmra.mxu0 %v1829
    %v1912 = vpop.f32.mrf.mxu0
    %v1913 = vadd.f32 %v1818, %v1912
    %v1914 = vpop.f32.mrf.mxu0
    %1915 = vdwg.mxu0
    %1916 = vst [vmem:[#allocation7] sm:$0xff] %v1898
    %1917 = vst [vmem:[#allocation7 + $0x8] sm:$0xff] %v1903
    %1918 = vst [vmem:[#allocation7 + $0x10] sm:$0xff] %v1908
    %1919 = vst [vmem:[#allocation7 + $0x18] sm:$0xff] %v1913
    // Predicated region
    $region18: #{multi_head_attention_fwd.1} parent=1 // pred_check
      _
    $region19: #{multi_head_attention_fwd.1} parent=1 // pred_check_branch
      %1921 = sbr.rel (0) target = $region21
    $region20: #{multi_head_attention_fwd.1} parent=1 // pred_region
      %s1923 = ssub.s32 512, 512
      %1924 = vsyncadd [#allocation4], %s1923
      %s1925 = sshll.u32 [#allocation7], 4
      %s1926 = int_to_ptr.vmem [resolvable:$true] %s1925
      %1931 = dma.vmem_to_hbm [thread:$0]  %s1926, 512, %s2, [#allocation4], 128, 128, 8
    $region21: #{multi_head_attention_fwd.1} parent=1 // pred_fallthru
      _
    // Predicated region
    $region22: #{multi_head_attention_fwd.1} parent=1 // pred_check
      _
    $region23: #{multi_head_attention_fwd.1} parent=1 // pred_check_branch
      %1933 = sbr.rel (0) target = $region25
    $region24: #{multi_head_attention_fwd.1} parent=1 // pred_region
      %1934 = dma.done [#allocation4], 512
    $region25: #{multi_head_attention_fwd.1} parent=1 // pred_fallthru
      _
    %1935 = vsyncpa [#allocation3], 1
    %1936 = vsyncpa [#allocation6], 1
    %1937 = vsyncpa [#allocation4], 1

</llo_original>
